<compile_context>
chip_gen: v7x
topology: tpu7x:2x2x1
jax: 0.10.0
libtpu: 0.0.40
codegen_flags: <defaults>
</compile_context>

<pallas_src>
import jax
import jax.numpy as jnp
from jax.experimental import pallas as pl
from jax.experimental.pallas import tpu as pltpu

LANE = 128  # lane width / padded final-predictor output width


# ----------------------------------------------------------------------------
# Fused kernel:
#   h = relu(Ahat @ (X @ W1) + b1)
#   h = relu(Ahat @ (h @ W2) + b2)
#   h =      Ahat @ (h @ W3) + b3
#   g = onehot(src||dst) @ h            (single merged gather matmul, f32 exact)
#   z = g[:E] * g[E:]
#   out = relu(z@P1+pb1) -> relu(.@P2+pb2) -> .@P3_pad + pb3      (E, 128) bf16
# ----------------------------------------------------------------------------
def fused_gcn_kernel(a_ref, x_ref, idx_ref, w_ref, b_ref, pw3_ref, pb3_ref,
                     o_ref):
    f32, bf16 = jnp.float32, jnp.bfloat16
    a = a_ref[...]                 # (N, N) bf16 (pre-cast in wrapper)

    hid = w_ref.shape[1]           # 32
    in_size = x_ref.shape[1]       # 64
    o1 = in_size                   # row offsets in the weight stack
    # Weight stack rows: [gw1(in_size); gw2(hid); gw3(hid); pw1(hid); pw2(hid)]
    # (all offsets are multiples of 16 -> aligned to the bf16 sublane tiling).
    gw1 = w_ref[0:o1, :]
    gw2 = w_ref[o1:o1 + hid, :]
    gw3 = w_ref[o1 + hid:o1 + 2 * hid, :]
    pw1 = w_ref[o1 + 2 * hid:o1 + 3 * hid, :]
    pw2 = w_ref[o1 + 3 * hid:o1 + 4 * hid, :]
    # Bias stack rows: [gb1; gb2; gb3; pb1; pb2; 0; 0; 0]   (f32, exact adds)
    gb1 = b_ref[0:1, :]
    gb2 = b_ref[1:2, :]
    gb3 = b_ref[2:3, :]
    pb1 = b_ref[3:4, :]
    pb2 = b_ref[4:5, :]

    def gconv(h_bf16, w, b, relu):
        xw = jnp.dot(h_bf16, w, preferred_element_type=f32)        # (N, hid)
        h = jnp.dot(a, xw.astype(bf16), preferred_element_type=f32) + b
        return jnp.maximum(h, 0.0) if relu else h

    h = gconv(x_ref[...], gw1, gb1, True)        # x already bf16
    h = gconv(h.astype(bf16), gw2, gb2, True)
    h = gconv(h.astype(bf16), gw3, gb3, False)   # (N, hid) f32

    # Merged in-kernel edge gather: one exact one-hot selection matmul over the
    # concatenated src||dst index vector (kept in f32 so the gathered rows of h
    # are not re-rounded).
    n = a_ref.shape[0]
    e2 = idx_ref.shape[0]                        # 2E
    e = e2 // 2
    cols = jax.lax.broadcasted_iota(jnp.int32, (e2, n), 1)
    oh = (cols == idx_ref[...]).astype(f32)      # (2E, N)
    g = jnp.dot(oh, h, preferred_element_type=f32)   # (2E, hid)
    z = g[0:e, :] * g[e:e2, :]                   # (E, hid) = h[src] * h[dst]

    # Edge predictor MLP (2 ReLU layers + lane-padded final linear).
    z = jnp.maximum(
        jnp.dot(z.astype(bf16), pw1, preferred_element_type=f32) + pb1, 0.0)
    z = jnp.maximum(
        jnp.dot(z.astype(bf16), pw2, preferred_element_type=f32) + pb2, 0.0)
    out = jnp.dot(z.astype(bf16), pw3_ref[...],
                  preferred_element_type=f32) + pb3_ref[0]
    o_ref[...] = out.astype(o_ref.dtype)         # lane-dense (E, 128) bf16 store


def _cost_estimate(n, in_size, hid, e_total):
    flops = 2 * (n * in_size * hid + n * n * hid          # layer 1
                 + 2 * (n * hid * hid + n * n * hid)      # layers 2, 3
                 + 2 * e_total * n * hid                  # merged one-hot gather
                 + 2 * e_total * hid * hid                # predictor 1, 2
                 + e_total * hid * LANE)                  # predictor 3 (padded)
    bytes_accessed = (
        2 * (n * n + n * in_size                          # Ahat, X        (bf16)
             + (in_size + 4 * hid) * hid                  # weight stack   (bf16)
             + hid * LANE                                 # pw3_pad        (bf16)
             + e_total * LANE)                            # output slab    (bf16)
        + 4 * (8 * hid + 1 + 2 * e_total))                # biases, pb3, idx
    return pl.CostEstimate(flops=flops, transcendentals=0,
                           bytes_accessed=bytes_accessed)


# ----------------------------------------------------------------------------
# Full GCN forward — single fused pallas_call
# ----------------------------------------------------------------------------
def gcn_forward(ahat, x, gcn_params, pred_params, pos_edges, neg_edges):
    (gw1, gb1), (gw2, gb2), (gw3, gb3) = gcn_params
    (pw1, pb1), (pw2, pb2), (pw3, pb3) = pred_params
    n, in_size = x.shape
    hid = gw1.shape[1]
    bf16 = jnp.bfloat16

    pos_src, pos_dst = pos_edges
    neg_src, neg_dst = neg_edges
    e_pos = pos_src.shape[0]
    # NOTE: edge indices must be in [0, n); out-of-range rows would silently
    # gather zeros (no runtime bounds check in-kernel).
    src = jnp.concatenate([pos_src, neg_src]).astype(jnp.int32)
    dst = jnp.concatenate([pos_dst, neg_dst]).astype(jnp.int32)
    e_total = src.shape[0]
    idx = jnp.concatenate([src, dst]).reshape(-1, 1)          # (2E, 1)

    # Pre-cast MXU operands to bf16 in the wrapper (f32 accumulation in-kernel).
    ahat_b = ahat.astype(bf16)
    x_b = x.astype(bf16)
    # Pack the five small weight matrices along the sublane axis (rows are
    # multiples of 16, so the in-kernel static slices stay tile-aligned).
    w_stack = jnp.concatenate([gw1, gw2, gw3, pw1, pw2], axis=0).astype(bf16)
    # Pack the five (hid,) biases (kept f32: they are added to f32 accumulators).
    b_stack = (jnp.zeros((8, hid), jnp.float32)
               .at[0].set(gb1).at[1].set(gb2).at[2].set(gb3)
               .at[3].set(pb1).at[4].set(pb2))
    # Zero-pad the final predictor weight so the kernel writes a lane-dense
    # (E, 128) slab instead of a masked (E, 1) column.
    pw3_pad = jnp.zeros((hid, LANE), bf16).at[:, :pw3.shape[1]].set(
        pw3.astype(bf16))
    pb3_s = pb3.reshape(1).astype(jnp.float32)                # SMEM scalar

    vmem = pl.BlockSpec(memory_space=pltpu.MemorySpace.VMEM)
    smem = pl.BlockSpec(memory_space=pltpu.MemorySpace.SMEM)
    out = pl.pallas_call(
        fused_gcn_kernel,
        out_shape=jax.ShapeDtypeStruct((e_total, LANE), bf16),
        in_specs=[vmem, vmem, vmem, vmem, vmem, vmem, smem],
        out_specs=vmem,
        cost_estimate=_cost_estimate(n, in_size, hid, e_total),
    )(ahat_b, x_b, idx, w_stack, b_stack, pw3_pad, pb3_s)

    scores = out[:, :1].astype(jnp.float32)
    return scores[:e_pos], scores[e_pos:]


# ----------------------------------------------------------------------------
# Deterministic parameter / input construction
# ----------------------------------------------------------------------------
def glorot(key, shape):
    fan_in, fan_out = shape
    limit = jnp.sqrt(6.0 / (fan_in + fan_out))
    return jax.random.uniform(key, shape, jnp.float32, -limit, limit)


def build_params(key, in_size, hid_size, num_layers=3):
    keys = jax.random.split(key, num_layers + 3)
    gcn_params = []
    dims = [in_size] + [hid_size] * num_layers
    for l in range(num_layers):
        w = glorot(keys[l], (dims[l], dims[l + 1]))
        b = jnp.zeros((dims[l + 1],), jnp.float32)
        gcn_params.append((w, b))
    pred_params = [
        (glorot(keys[num_layers + 0], (hid_size, hid_size)),
         jnp.zeros((hid_size,), jnp.float32)),
        (glorot(keys[num_layers + 1], (hid_size, hid_size)),
         jnp.zeros((hid_size,), jnp.float32)),
        (glorot(keys[num_layers + 2], (hid_size, 1)),
         jnp.zeros((1,), jnp.float32)),
    ]
    return gcn_params, pred_params


def build_graph(key, n_nodes, avg_deg=8):
    # random dense adjacency with self-loops so no zero degrees
    a = (jax.random.uniform(key, (n_nodes, n_nodes)) <
         (avg_deg / n_nodes)).astype(jnp.float32)
    a = a + jnp.eye(n_nodes, dtype=jnp.float32)
    a = jnp.minimum(a, 1.0)
    out_deg = a.sum(axis=0)   # degree of source nodes (columns)
    in_deg = a.sum(axis=1)    # degree of destination nodes (rows)
    # DGL GraphConv norm='both':  D_dst^{-1/2} A D_src^{-1/2}
    ahat = a * (in_deg[:, None] ** -0.5) * (out_deg[None, :] ** -0.5)
    return ahat


if __name__ == "__main__":
    N = 128          # nodes
    IN_SIZE = 64     # input feature size
    HID = 32         # hidden size
    E_POS = 64       # positive edges
    E_NEG = 96       # negative edges

    root = jax.random.PRNGKey(0)
    k_graph, k_feat, k_param, k_pe, k_ne = jax.random.split(root, 5)

    ahat = build_graph(k_graph, N)
    x = jax.random.normal(k_feat, (N, IN_SIZE), jnp.float32)
    gcn_params, pred_params = build_params(k_param, IN_SIZE, HID, num_layers=3)

    pos_edges = tuple(jax.random.randint(k, (E_POS,), 0, N)
                      for k in jax.random.split(k_pe, 2))
    neg_edges = tuple(jax.random.randint(k, (E_NEG,), 0, N)
                      for k in jax.random.split(k_ne, 2))

    h_pos, h_neg = jax.jit(gcn_forward)(
        ahat, x, gcn_params, pred_params, pos_edges, neg_edges)
    jax.block_until_ready((h_pos, h_neg))

    assert h_pos.shape == (E_POS, 1) and h_neg.shape == (E_NEG, 1)
    assert jnp.all(jnp.isfinite(h_pos)) and jnp.all(jnp.isfinite(h_neg))
    print("KERNEL_OK")
</pallas_src>

<mosaic_0001>
module attributes {stable_mosaic.version = 11 : i64} {
  func.func @fused_gcn_kernel(%arg0: memref<128x128xbf16, #tpu.memory_space<vmem>>, %arg1: memref<128x64xbf16, #tpu.memory_space<vmem>>, %arg2: memref<320x1xi32, #tpu.memory_space<vmem>>, %arg3: memref<192x32xbf16, #tpu.memory_space<vmem>>, %arg4: memref<8x32xf32, #tpu.memory_space<vmem>>, %arg5: memref<32x128xbf16, #tpu.memory_space<vmem>>, %arg6: memref<1xf32, #tpu.memory_space<smem>>, %arg7: memref<160x128xbf16, #tpu.memory_space<vmem>>) attributes {dimension_semantics = [], scalar_prefetch = 0 : i64, scratch_operands = 0 : i64, tpu.core_type = #tpu.core_type<tc>} {
    %c0 = arith.constant 0 : index
    %c0_0 = arith.constant 0 : index
    %0 = vector.load %arg0[%c0, %c0_0] : memref<128x128xbf16, #tpu.memory_space<vmem>>, vector<128x128xbf16>
    %c0_1 = arith.constant 0 : index
    %c0_2 = arith.constant 0 : index
    %1 = vector.load %arg3[%c0_1, %c0_2] : memref<192x32xbf16, #tpu.memory_space<vmem>>, vector<64x32xbf16>
    %c64 = arith.constant 64 : index
    %c0_3 = arith.constant 0 : index
    %2 = vector.load %arg3[%c64, %c0_3] : memref<192x32xbf16, #tpu.memory_space<vmem>>, vector<32x32xbf16>
    %c96 = arith.constant 96 : index
    %c0_4 = arith.constant 0 : index
    %3 = vector.load %arg3[%c96, %c0_4] : memref<192x32xbf16, #tpu.memory_space<vmem>>, vector<32x32xbf16>
    %c128 = arith.constant 128 : index
    %c0_5 = arith.constant 0 : index
    %4 = vector.load %arg3[%c128, %c0_5] : memref<192x32xbf16, #tpu.memory_space<vmem>>, vector<32x32xbf16>
    %c160 = arith.constant 160 : index
    %c0_6 = arith.constant 0 : index
    %5 = vector.load %arg3[%c160, %c0_6] : memref<192x32xbf16, #tpu.memory_space<vmem>>, vector<32x32xbf16>
    %c0_7 = arith.constant 0 : index
    %c0_8 = arith.constant 0 : index
    %6 = vector.load %arg4[%c0_7, %c0_8] : memref<8x32xf32, #tpu.memory_space<vmem>>, vector<1x32xf32>
    %c1 = arith.constant 1 : index
    %c0_9 = arith.constant 0 : index
    %7 = vector.load %arg4[%c1, %c0_9] : memref<8x32xf32, #tpu.memory_space<vmem>>, vector<1x32xf32>
    %c2 = arith.constant 2 : index
    %c0_10 = arith.constant 0 : index
    %8 = vector.load %arg4[%c2, %c0_10] : memref<8x32xf32, #tpu.memory_space<vmem>>, vector<1x32xf32>
    %c3 = arith.constant 3 : index
    %c0_11 = arith.constant 0 : index
    %9 = vector.load %arg4[%c3, %c0_11] : memref<8x32xf32, #tpu.memory_space<vmem>>, vector<1x32xf32>
    %c4 = arith.constant 4 : index
    %c0_12 = arith.constant 0 : index
    %10 = vector.load %arg4[%c4, %c0_12] : memref<8x32xf32, #tpu.memory_space<vmem>>, vector<1x32xf32>
    %c0_13 = arith.constant 0 : index
    %c0_14 = arith.constant 0 : index
    %11 = vector.load %arg1[%c0_13, %c0_14] : memref<128x64xbf16, #tpu.memory_space<vmem>>, vector<128x64xbf16>
    %cst = arith.constant dense<0.000000e+00> : vector<128x32xf32>
    %12 = tpu.matmul %11, %1, %cst {dimension_numbers = #tpu.dot_dimension_numbers<[1], [0], [0], [1], [0, 0, 1, 1], [], []>} : vector<128x64xbf16>, vector<64x32xbf16>, vector<128x32xf32> -> vector<128x32xf32>
    %13 = arith.truncf %12 : vector<128x32xf32> to vector<128x32xbf16>
    %cst_15 = arith.constant dense<0.000000e+00> : vector<128x32xf32>
    %14 = tpu.matmul %0, %13, %cst_15 {dimension_numbers = #tpu.dot_dimension_numbers<[1], [0], [0], [1], [0, 0, 1, 1], [], []>} : vector<128x128xbf16>, vector<128x32xbf16>, vector<128x32xf32> -> vector<128x32xf32>
    %15 = vector.broadcast %6 : vector<1x32xf32> to vector<128x32xf32>
    %16 = arith.addf %14, %15 : vector<128x32xf32>
    %cst_16 = arith.constant 0.000000e+00 : f32
    %17 = vector.broadcast %cst_16 : f32 to vector<128x32xf32>
    %18 = arith.maximumf %16, %17 : vector<128x32xf32>
    %19 = arith.truncf %18 : vector<128x32xf32> to vector<128x32xbf16>
    %cst_17 = arith.constant dense<0.000000e+00> : vector<128x32xf32>
    %20 = tpu.matmul %19, %2, %cst_17 {dimension_numbers = #tpu.dot_dimension_numbers<[1], [0], [0], [1], [0, 0, 1, 1], [], []>} : vector<128x32xbf16>, vector<32x32xbf16>, vector<128x32xf32> -> vector<128x32xf32>
    %21 = arith.truncf %20 : vector<128x32xf32> to vector<128x32xbf16>
    %cst_18 = arith.constant dense<0.000000e+00> : vector<128x32xf32>
    %22 = tpu.matmul %0, %21, %cst_18 {dimension_numbers = #tpu.dot_dimension_numbers<[1], [0], [0], [1], [0, 0, 1, 1], [], []>} : vector<128x128xbf16>, vector<128x32xbf16>, vector<128x32xf32> -> vector<128x32xf32>
    %23 = vector.broadcast %7 : vector<1x32xf32> to vector<128x32xf32>
    %24 = arith.addf %22, %23 : vector<128x32xf32>
    %cst_19 = arith.constant 0.000000e+00 : f32
    %25 = vector.broadcast %cst_19 : f32 to vector<128x32xf32>
    %26 = arith.maximumf %24, %25 : vector<128x32xf32>
    %27 = arith.truncf %26 : vector<128x32xf32> to vector<128x32xbf16>
    %cst_20 = arith.constant dense<0.000000e+00> : vector<128x32xf32>
    %28 = tpu.matmul %27, %3, %cst_20 {dimension_numbers = #tpu.dot_dimension_numbers<[1], [0], [0], [1], [0, 0, 1, 1], [], []>} : vector<128x32xbf16>, vector<32x32xbf16>, vector<128x32xf32> -> vector<128x32xf32>
    %29 = arith.truncf %28 : vector<128x32xf32> to vector<128x32xbf16>
    %cst_21 = arith.constant dense<0.000000e+00> : vector<128x32xf32>
    %30 = tpu.matmul %0, %29, %cst_21 {dimension_numbers = #tpu.dot_dimension_numbers<[1], [0], [0], [1], [0, 0, 1, 1], [], []>} : vector<128x128xbf16>, vector<128x32xbf16>, vector<128x32xf32> -> vector<128x32xf32>
    %31 = vector.broadcast %8 : vector<1x32xf32> to vector<128x32xf32>
    %32 = arith.addf %30, %31 : vector<128x32xf32>
    %33 = tpu.iota {dimensions = array<i32: 1>} : vector<320x128xi32>
    %c0_22 = arith.constant 0 : index
    %c0_23 = arith.constant 0 : index
    %34 = vector.load %arg2[%c0_22, %c0_23] : memref<320x1xi32, #tpu.memory_space<vmem>>, vector<320x1xi32>
    %35 = vector.broadcast %34 : vector<320x1xi32> to vector<320x128xi32>
    %36 = arith.cmpi eq, %33, %35 : vector<320x128xi32>
    %37 = arith.extui %36 : vector<320x128xi1> to vector<320x128xi32>
    %38 = arith.sitofp %37 : vector<320x128xi32> to vector<320x128xf32>
    %cst_24 = arith.constant dense<0.000000e+00> : vector<320x32xf32>
    %39 = tpu.matmul %38, %32, %cst_24 {dimension_numbers = #tpu.dot_dimension_numbers<[1], [0], [0], [1], [0, 0, 1, 1], [], []>} : vector<320x128xf32>, vector<128x32xf32>, vector<320x32xf32> -> vector<320x32xf32>
    %40 = vector.extract_strided_slice %39 {offsets = [0, 0], sizes = [160, 32], strides = [1, 1]} : vector<320x32xf32> to vector<160x32xf32>
    %41 = vector.extract_strided_slice %39 {offsets = [160, 0], sizes = [160, 32], strides = [1, 1]} : vector<320x32xf32> to vector<160x32xf32>
    %42 = arith.mulf %40, %41 : vector<160x32xf32>
    %43 = arith.truncf %42 : vector<160x32xf32> to vector<160x32xbf16>
    %cst_25 = arith.constant dense<0.000000e+00> : vector<160x32xf32>
    %44 = tpu.matmul %43, %4, %cst_25 {dimension_numbers = #tpu.dot_dimension_numbers<[1], [0], [0], [1], [0, 0, 1, 1], [], []>} : vector<160x32xbf16>, vector<32x32xbf16>, vector<160x32xf32> -> vector<160x32xf32>
    %45 = vector.broadcast %9 : vector<1x32xf32> to vector<160x32xf32>
    %46 = arith.addf %44, %45 : vector<160x32xf32>
    %cst_26 = arith.constant 0.000000e+00 : f32
    %47 = vector.broadcast %cst_26 : f32 to vector<160x32xf32>
    %48 = arith.maximumf %46, %47 : vector<160x32xf32>
    %49 = arith.truncf %48 : vector<160x32xf32> to vector<160x32xbf16>
    %cst_27 = arith.constant dense<0.000000e+00> : vector<160x32xf32>
    %50 = tpu.matmul %49, %5, %cst_27 {dimension_numbers = #tpu.dot_dimension_numbers<[1], [0], [0], [1], [0, 0, 1, 1], [], []>} : vector<160x32xbf16>, vector<32x32xbf16>, vector<160x32xf32> -> vector<160x32xf32>
    %51 = vector.broadcast %10 : vector<1x32xf32> to vector<160x32xf32>
    %52 = arith.addf %50, %51 : vector<160x32xf32>
    %cst_28 = arith.constant 0.000000e+00 : f32
    %53 = vector.broadcast %cst_28 : f32 to vector<160x32xf32>
    %54 = arith.maximumf %52, %53 : vector<160x32xf32>
    %55 = arith.truncf %54 : vector<160x32xf32> to vector<160x32xbf16>
    %c0_29 = arith.constant 0 : index
    %c0_30 = arith.constant 0 : index
    %56 = vector.load %arg5[%c0_29, %c0_30] : memref<32x128xbf16, #tpu.memory_space<vmem>>, vector<32x128xbf16>
    %cst_31 = arith.constant dense<0.000000e+00> : vector<160x128xf32>
    %57 = tpu.matmul %55, %56, %cst_31 {dimension_numbers = #tpu.dot_dimension_numbers<[1], [0], [0], [1], [0, 0, 1, 1], [], []>} : vector<160x32xbf16>, vector<32x128xbf16>, vector<160x128xf32> -> vector<160x128xf32>
    %c0_32 = arith.constant 0 : index
    %58 = memref.load %arg6[%c0_32] : memref<1xf32, #tpu.memory_space<smem>>
    %59 = vector.broadcast %58 : f32 to vector<160x128xf32>
    %60 = arith.addf %57, %59 : vector<160x128xf32>
    %61 = arith.truncf %60 : vector<160x128xf32> to vector<160x128xbf16>
    %c0_33 = arith.constant 0 : index
    %c0_34 = arith.constant 0 : index
    %62 = vector.load %arg7[%c0_33, %c0_34] : memref<160x128xbf16, #tpu.memory_space<vmem>>, vector<160x128xbf16>
    tpu.vector_store %arg7[%c0_33, %c0_34], %61 {strides = array<i32>} : memref<160x128xbf16, #tpu.memory_space<vmem>>, vector<160x128xbf16>,
    return
  }
}

</mosaic_0001>

<llo_original>
// kernel: gcn_forward.1
$region0: #{gcn_forward.1}
  #allocation0 [shape = 'u32[]', space=smem, size = 0x4, offset = 0x4, fixed_abs, tag = 'smem constant byte address 0x4 - core index']
  #allocation1 [shape = 'u32[144,128]{1,0:T(1,128)}', space=vmem, size = 0x12000, scoped, tag = 'internal scratch']
  #allocation2 [shape = 'f32[1]{0:T(128)S(6)}', space=smem, size = 0x200, scoped, tag = 'scoped memory for gcn_forward.1']
  %s0 = inlined_call_operand.vmem [shape: bf16[128,128], index: 0, kind: input, shape index: {}]
  %s1 = inlined_call_operand.vmem [shape: bf16[128,64], index: 1, kind: input, shape index: {}]
  %s2 = inlined_call_operand.vmem [shape: s32[320,1], index: 2, kind: input, shape index: {}]
  %s3 = inlined_call_operand.vmem [shape: bf16[192,32], index: 3, kind: input, shape index: {}]
  %s4 = inlined_call_operand.vmem [shape: f32[8,32], index: 4, kind: input, shape index: {}]
  %s5 = inlined_call_operand.vmem [shape: bf16[32,128], index: 5, kind: input, shape index: {}]
  %s6 = inlined_call_operand.<no memory space> [shape: f32[1], index: 6, kind: input, shape index: {}]
  %s7 = inlined_call_operand.vmem [shape: bf16[160,128], index: 7, kind: output, shape index: {}]
  %s8 = sld [smem:[#allocation0]]
  $region38: #{gcn_forward.1} parent=0
    _
  %s10 = ssub.s32 1, %s8
  %s11 = scalar_select 0, %s10, %s8
  %12 = sst [smem:[#allocation2]] %s6
  // Predicated region
  $region2: #{gcn_forward.1} parent=0 // pred_check
    _
  $region3: #{gcn_forward.1} parent=0 // pred_check_branch
    %14 = sbr.rel (0) target = $region5
  $region4: #{gcn_forward.1} parent=0 // pred_region
    _
  $region5: #{gcn_forward.1} parent=0 // pred_fallthru
    _
  // Predicated region
  $region6: #{gcn_forward.1} parent=0 // pred_check
    _
  $region7: #{gcn_forward.1} parent=0 // pred_check_branch
    %16 = sbr.rel (0) target = $region9
  $region8: #{gcn_forward.1} parent=0 // pred_region
    _
  $region9: #{gcn_forward.1} parent=0 // pred_fallthru
    _
  // Predicated region
  $region10: #{gcn_forward.1} parent=0 // pred_check
    _
  $region11: #{gcn_forward.1} parent=0 // pred_check_branch
    %18 = sbr.rel (0) target = $region13
  $region12: #{gcn_forward.1} parent=0 // pred_region
    _
  $region13: #{gcn_forward.1} parent=0 // pred_fallthru
    _
  // Predicated region
  $region14: #{gcn_forward.1} parent=0 // pred_check
    _
  $region15: #{gcn_forward.1} parent=0 // pred_check_branch
    %20 = sbr.rel (0) target = $region17
  $region16: #{gcn_forward.1} parent=0 // pred_region
    _
  $region17: #{gcn_forward.1} parent=0 // pred_fallthru
    _
  // Predicated region
  $region18: #{gcn_forward.1} parent=0 // pred_check
    _
  $region19: #{gcn_forward.1} parent=0 // pred_check_branch
    %22 = sbr.rel (0) target = $region21
  $region20: #{gcn_forward.1} parent=0 // pred_region
    _
  $region21: #{gcn_forward.1} parent=0 // pred_fallthru
    _
  // Predicated region
  $region22: #{gcn_forward.1} parent=0 // pred_check
    _
  $region23: #{gcn_forward.1} parent=0 // pred_check_branch
    %24 = sbr.rel (0) target = $region25
  $region24: #{gcn_forward.1} parent=0 // pred_region
    _
  $region25: #{gcn_forward.1} parent=0 // pred_fallthru
    _
  // Predicated region
  $region26: #{gcn_forward.1} parent=0 // pred_check
    _
  $region27: #{gcn_forward.1} parent=0 // pred_check_branch
    %26 = sbr.rel (0) target = $region29
  $region28: #{gcn_forward.1} parent=0 // pred_region
    _
  $region29: #{gcn_forward.1} parent=0 // pred_fallthru
    _
  %v28 = vld [vmem:[%s0] sm:$0xf]
  %v29 = vld [vmem:[%s0 + $0x4] sm:$0xf]
  %v30 = vld [vmem:[%s0 + $0x8] sm:$0xf]
  %v31 = vld [vmem:[%s0 + $0xc] sm:$0xf]
  %v32 = vld [vmem:[%s0 + $0x10] sm:$0xf]
  %v33 = vld [vmem:[%s0 + $0x14] sm:$0xf]
  %v34 = vld [vmem:[%s0 + $0x18] sm:$0xf]
  %v35 = vld [vmem:[%s0 + $0x1c] sm:$0xf]
  %v36 = vld [vmem:[%s0 + $0x20] sm:$0xf]
  %v37 = vld [vmem:[%s0 + $0x24] sm:$0xf]
  %v38 = vld [vmem:[%s0 + $0x28] sm:$0xf]
  %v39 = vld [vmem:[%s0 + $0x2c] sm:$0xf]
  %v40 = vld [vmem:[%s0 + $0x30] sm:$0xf]
  %v41 = vld [vmem:[%s0 + $0x34] sm:$0xf]
  %v42 = vld [vmem:[%s0 + $0x38] sm:$0xf]
  %v43 = vld [vmem:[%s0 + $0x3c] sm:$0xf]
  %v44 = vld [vmem:[%s3] sm:$0xf]
  %v45 = vld [vmem:[%s3 + $0x4] sm:$0xf]
  %v46 = vld [vmem:[%s3 + $0x8] sm:$0xf]
  %v47 = vld [vmem:[%s3 + $0xc] sm:$0xf]
  %v48 = vld [vmem:[%s3 + $0x10] sm:$0xf]
  %v49 = vld [vmem:[%s3 + $0x14] sm:$0xf]
  %v50 = vld [vmem:[%s3 + $0x18] sm:$0xf]
  %v51 = vld [vmem:[%s3 + $0x1c] sm:$0xf]
  %v52 = vld [vmem:[%s3 + $0x20] sm:$0xf]
  %v53 = vld [vmem:[%s3 + $0x24] sm:$0xf]
  %v54 = vld [vmem:[%s3 + $0x28] sm:$0xf]
  %v55 = vld [vmem:[%s3 + $0x2c] sm:$0xf]
  %v56 = vld [vmem:[%s3 + $0x30] sm:$0xf]
  %v57 = vld [vmem:[%s3 + $0x34] sm:$0xf]
  %v58 = vld [vmem:[%s3 + $0x38] sm:$0xf]
  %v59 = vld [vmem:[%s3 + $0x3c] sm:$0xf]
  %v60 = vld [vmem:[%s3 + $0x40] sm:$0xf]
  %v61 = vld [vmem:[%s3 + $0x44] sm:$0xf]
  %v62 = vld [vmem:[%s3 + $0x48] sm:$0xf]
  %v63 = vld [vmem:[%s3 + $0x4c] sm:$0xf]
  %v64 = vld [vmem:[%s3 + $0x50] sm:$0xf]
  %v65 = vld [vmem:[%s3 + $0x54] sm:$0xf]
  %v66 = vld [vmem:[%s3 + $0x58] sm:$0xf]
  %v67 = vld [vmem:[%s3 + $0x5c] sm:$0xf]
  %v68 = vld [vmem:[%s4] sm:$0x1]
  %v69 = vld [vmem:[%s4 + $0x1] sm:$0x1]
  %v70 = vld [vmem:[%s4 + $0x2] sm:$0x1]
  %v71 = vld [vmem:[%s4 + $0x3] sm:$0x1]
  %v72 = vld [vmem:[%s4 + $0x4] sm:$0x1]
  %v73 = vld [vmem:[%s1] sm:$0xf]
  %v74 = vld [vmem:[%s1 + $0x4] sm:$0xf]
  %v75 = vld [vmem:[%s1 + $0x8] sm:$0xf]
  %v76 = vld [vmem:[%s1 + $0xc] sm:$0xf]
  %v77 = vld [vmem:[%s1 + $0x10] sm:$0xf]
  %v78 = vld [vmem:[%s1 + $0x14] sm:$0xf]
  %v79 = vld [vmem:[%s1 + $0x18] sm:$0xf]
  %v80 = vld [vmem:[%s1 + $0x1c] sm:$0xf]
  %v81 = vld [vmem:[%s1 + $0x20] sm:$0xf]
  %v82 = vld [vmem:[%s1 + $0x24] sm:$0xf]
  %v83 = vld [vmem:[%s1 + $0x28] sm:$0xf]
  %v84 = vld [vmem:[%s1 + $0x2c] sm:$0xf]
  %v85 = vld [vmem:[%s1 + $0x30] sm:$0xf]
  %v86 = vld [vmem:[%s1 + $0x34] sm:$0xf]
  %v87 = vld [vmem:[%s1 + $0x38] sm:$0xf]
  %v88 = vld [vmem:[%s1 + $0x3c] sm:$0xf]
  %v105 = vunpack.c.l.b16 %v73
  %v106 = vunpack.c.l.b16 %v74
  %v107 = vunpack.c.l.b16 %v75
  %v108 = vunpack.c.l.b16 %v76
  %v109 = vunpack.c.l.b16 %v77
  %v110 = vunpack.c.l.b16 %v78
  %v111 = vunpack.c.l.b16 %v79
  %v112 = vunpack.c.l.b16 %v80
  %v113 = vunpack.c.l.b16 %v81
  %v114 = vunpack.c.l.b16 %v82
  %v115 = vunpack.c.l.b16 %v83
  %v116 = vunpack.c.l.b16 %v84
  %v117 = vunpack.c.l.b16 %v85
  %v118 = vunpack.c.l.b16 %v86
  %v119 = vunpack.c.l.b16 %v87
  %v120 = vunpack.c.l.b16 %v88
  %v121 = vpack.c.b16 %v106, %v105
  %v122 = vpack.c.b16 %v108, %v107
  %v123 = vpack.c.b16 %v110, %v109
  %v124 = vpack.c.b16 %v112, %v111
  %v125 = vpack.c.b16 %v114, %v113
  %v126 = vpack.c.b16 %v116, %v115
  %v127 = vpack.c.b16 %v118, %v117
  %v128 = vpack.c.b16 %v120, %v119
  %v137 = vunpack.c.l.b16 %v44
  %v138 = vunpack.c.l.b16 %v45
  %v139 = vunpack.c.l.b16 %v46
  %v140 = vunpack.c.l.b16 %v47
  %v141 = vunpack.c.l.b16 %v48
  %v142 = vunpack.c.l.b16 %v49
  %v143 = vunpack.c.l.b16 %v50
  %v144 = vunpack.c.l.b16 %v51
  %v145 = vpack.c.b16 %v138, %v137
  %v146 = vpack.c.b16 %v140, %v139
  %v147 = vpack.c.b16 %v142, %v141
  %v148 = vpack.c.b16 %v144, %v143
  %vm153 = vcmask 523264
  %v155 = vsel %vm153, %v121, 0
  %v158 = vsel %vm153, %v122, 0
  %v161 = vsel %vm153, %v123, 0
  %v164 = vsel %vm153, %v124, 0
  %v167 = vsel %vm153, %v125, 0
  %v170 = vsel %vm153, %v126, 0
  %v173 = vsel %vm153, %v127, 0
  %v176 = vsel %vm153, %v128, 0
  %178 = vmatprep.subr.bf16.mxu0 0
  %179 = vmatpush1.bf16.msra.mxu0 %v145
  %180 = vmatprep.subr.bf16.mxu0 0
  %181 = vmatpush1.bf16.msra.mxu0 %v146
  %182 = vmatprep.subr.bf16.mxu0 0
  %183 = vmatpush1.bf16.msra.mxu0 %v147
  %184 = vmatprep.subr.bf16.mxu0 0
  %185 = vmatpush1.bf16.msra.mxu0 %v148
  %186 = vmatprep.subr.bf16.mxu0 0
  %187 = vmatpush1.bf16.msra.mxu0 0
  %188 = vmatprep.subr.bf16.mxu0 0
  %189 = vmatpush1.bf16.msra.mxu0 0
  %190 = vmatprep.subr.bf16.mxu0 0
  %191 = vmatpush1.bf16.msra.mxu0 0
  %192 = vmatprep.subr.bf16.mxu0 0
  %193 = vmatpush1.bf16.msra.mxu0 0
  %194 = vmatprep.subr.bf16.mxu0 0
  %195 = vmatpush1.bf16.msra.mxu0 0
  %196 = vmatprep.subr.bf16.mxu0 0
  %197 = vmatpush1.bf16.msra.mxu0 0
  %198 = vmatprep.subr.bf16.mxu0 0
  %199 = vmatpush1.bf16.msra.mxu0 0
  %200 = vmatprep.subr.bf16.mxu0 0
  %201 = vmatpush1.bf16.msra.mxu0 0
  %202 = vmatprep.subr.bf16.mxu0 0
  %203 = vmatpush1.bf16.msra.mxu0 0
  %204 = vmatprep.subr.bf16.mxu0 0
  %205 = vmatpush1.bf16.msra.mxu0 0
  %206 = vmatprep.subr.bf16.mxu0 0
  %207 = vmatpush1.bf16.msra.mxu0 0
  %208 = vmatprep.subr.bf16.mxu0 0
  %209 = vmatpush1.bf16.msra.mxu0 0
  %210 = vmatprep.mubr.bf16.mxu0 0
  %211 = vmatmul.mubr.bf16.gmra.mrb[0].mxu0 %v155
  %v212 = vpop.f32.mrb[0].mxu0
  %v213 = vadd.f32 0.0, %v212
  %v214 = vpop.f32.mrb[0].mxu0
  %v215 = vpop.f32.mrb[0].mxu0
  %v216 = vadd.f32 0.0, %v215
  %v217 = vpop.f32.mrb[0].mxu0
  %218 = vmatprep.mubr.bf16.mxu0 0
  %219 = vmatmul.mubr.bf16.gmra.mrb[0].mxu0 %v158
  %v220 = vpop.f32.mrb[0].mxu0
  %v221 = vadd.f32 0.0, %v220
  %v222 = vpop.f32.mrb[0].mxu0
  %v223 = vpop.f32.mrb[0].mxu0
  %v224 = vadd.f32 0.0, %v223
  %v225 = vpop.f32.mrb[0].mxu0
  %226 = vmatprep.mubr.bf16.mxu0 0
  %227 = vmatmul.mubr.bf16.gmra.mrb[0].mxu0 %v161
  %v228 = vpop.f32.mrb[0].mxu0
  %v229 = vadd.f32 0.0, %v228
  %v230 = vpop.f32.mrb[0].mxu0
  %v231 = vpop.f32.mrb[0].mxu0
  %v232 = vadd.f32 0.0, %v231
  %v233 = vpop.f32.mrb[0].mxu0
  %234 = vmatprep.mubr.bf16.mxu0 0
  %235 = vmatmul.mubr.bf16.gmra.mrb[0].mxu0 %v164
  %v236 = vpop.f32.mrb[0].mxu0
  %v237 = vadd.f32 0.0, %v236
  %v238 = vpop.f32.mrb[0].mxu0
  %v239 = vpop.f32.mrb[0].mxu0
  %v240 = vadd.f32 0.0, %v239
  %v241 = vpop.f32.mrb[0].mxu0
  %242 = vmatprep.mubr.bf16.mxu0 0
  %243 = vmatmul.mubr.bf16.gmra.mrb[0].mxu0 %v167
  %v244 = vpop.f32.mrb[0].mxu0
  %v245 = vadd.f32 0.0, %v244
  %v246 = vpop.f32.mrb[0].mxu0
  %v247 = vpop.f32.mrb[0].mxu0
  %v248 = vadd.f32 0.0, %v247
  %v249 = vpop.f32.mrb[0].mxu0
  %250 = vmatprep.mubr.bf16.mxu0 0
  %251 = vmatmul.mubr.bf16.gmra.mrb[0].mxu0 %v170
  %v252 = vpop.f32.mrb[0].mxu0
  %v253 = vadd.f32 0.0, %v252
  %v254 = vpop.f32.mrb[0].mxu0
  %v255 = vpop.f32.mrb[0].mxu0
  %v256 = vadd.f32 0.0, %v255
  %v257 = vpop.f32.mrb[0].mxu0
  %258 = vmatprep.mubr.bf16.mxu0 0
  %259 = vmatmul.mubr.bf16.gmra.mrb[0].mxu0 %v173
  %v260 = vpop.f32.mrb[0].mxu0
  %v261 = vadd.f32 0.0, %v260
  %v262 = vpop.f32.mrb[0].mxu0
  %v263 = vpop.f32.mrb[0].mxu0
  %v264 = vadd.f32 0.0, %v263
  %v265 = vpop.f32.mrb[0].mxu0
  %266 = vmatprep.mubr.bf16.mxu0 0
  %267 = vmatmul.mubr.bf16.gmra.mrb[0].mxu0 %v176
  %v268 = vpop.f32.mrb[0].mxu0
  %v269 = vadd.f32 0.0, %v268
  %v270 = vpop.f32.mrb[0].mxu0
  %v271 = vpop.f32.mrb[0].mxu0
  %v272 = vadd.f32 0.0, %v271
  %v273 = vpop.f32.mrb[0].mxu0
  %274 = vdwg.mxu0
  %v275 = vpack.c.bf16 %v216, %v213
  %v276 = vpack.c.bf16 %v224, %v221
  %v277 = vpack.c.bf16 %v232, %v229
  %v278 = vpack.c.bf16 %v240, %v237
  %v279 = vpack.c.bf16 %v248, %v245
  %v280 = vpack.c.bf16 %v256, %v253
  %v281 = vpack.c.bf16 %v264, %v261
  %v282 = vpack.c.bf16 %v272, %v269
  %v283 = vlaneseq
  %v284 = vshrl.u32 %v283, 7
  %v285 = vsub.s32 0, %v284
  %v286 = vrot.slane %v68, %v285
  %v303 = vunpack.c.l.b16 %v28
  %v304 = vunpack.c.l.b16 %v29
  %v305 = vunpack.c.l.b16 %v30
  %v306 = vunpack.c.l.b16 %v31
  %v307 = vunpack.c.l.b16 %v32
  %v308 = vunpack.c.l.b16 %v33
  %v309 = vunpack.c.l.b16 %v34
  %v310 = vunpack.c.l.b16 %v35
  %v311 = vunpack.c.l.b16 %v36
  %v312 = vunpack.c.l.b16 %v37
  %v313 = vunpack.c.l.b16 %v38
  %v314 = vunpack.c.l.b16 %v39
  %v315 = vunpack.c.l.b16 %v40
  %v316 = vunpack.c.l.b16 %v41
  %v317 = vunpack.c.l.b16 %v42
  %v318 = vunpack.c.l.b16 %v43
  %v319 = vpack.c.b16 %v304, %v303
  %v320 = vpack.c.b16 %v306, %v305
  %v321 = vpack.c.b16 %v308, %v307
  %v322 = vpack.c.b16 %v310, %v309
  %v323 = vpack.c.b16 %v312, %v311
  %v324 = vpack.c.b16 %v314, %v313
  %v325 = vpack.c.b16 %v316, %v315
  %v326 = vpack.c.b16 %v318, %v317
  %335 = vmatprep.subr.bf16.mxu0 0
  %336 = vmatpush1.bf16.msra.mxu0 %v275
  %337 = vmatprep.subr.bf16.mxu0 0
  %338 = vmatpush1.bf16.msra.mxu0 %v276
  %339 = vmatprep.subr.bf16.mxu0 0
  %340 = vmatpush1.bf16.msra.mxu0 %v277
  %341 = vmatprep.subr.bf16.mxu0 0
  %342 = vmatpush1.bf16.msra.mxu0 %v278
  %343 = vmatprep.subr.bf16.mxu0 0
  %344 = vmatpush1.bf16.msra.mxu0 %v279
  %345 = vmatprep.subr.bf16.mxu0 0
  %346 = vmatpush1.bf16.msra.mxu0 %v280
  %347 = vmatprep.subr.bf16.mxu0 0
  %348 = vmatpush1.bf16.msra.mxu0 %v281
  %349 = vmatprep.subr.bf16.mxu0 0
  %350 = vmatpush1.bf16.msra.mxu0 %v282
  %351 = vmatprep.subr.bf16.mxu0 0
  %352 = vmatpush1.bf16.msra.mxu0 0
  %353 = vmatprep.subr.bf16.mxu0 0
  %354 = vmatpush1.bf16.msra.mxu0 0
  %355 = vmatprep.subr.bf16.mxu0 0
  %356 = vmatpush1.bf16.msra.mxu0 0
  %357 = vmatprep.subr.bf16.mxu0 0
  %358 = vmatpush1.bf16.msra.mxu0 0
  %359 = vmatprep.subr.bf16.mxu0 0
  %360 = vmatpush1.bf16.msra.mxu0 0
  %361 = vmatprep.subr.bf16.mxu0 0
  %362 = vmatpush1.bf16.msra.mxu0 0
  %363 = vmatprep.subr.bf16.mxu0 0
  %364 = vmatpush1.bf16.msra.mxu0 0
  %365 = vmatprep.subr.bf16.mxu0 0
  %366 = vmatpush1.bf16.msra.mxu0 0
  %367 = vmatprep.mubr.bf16.mxu0 0
  %368 = vmatmul.mubr.bf16.gmra.mrb[0].mxu0 %v319
  %v369 = vpop.f32.mrb[0].mxu0
  %v370 = vadd.f32 %v286, %v369
  %v371 = vpop.f32.mrb[0].mxu0
  %v372 = vpop.f32.mrb[0].mxu0
  %v373 = vadd.f32 %v286, %v372
  %v374 = vpop.f32.mrb[0].mxu0
  %375 = vmatprep.mubr.bf16.mxu0 0
  %376 = vmatmul.mubr.bf16.gmra.mrb[0].mxu0 %v320
  %v377 = vpop.f32.mrb[0].mxu0
  %v378 = vadd.f32 %v286, %v377
  %v379 = vpop.f32.mrb[0].mxu0
  %v380 = vpop.f32.mrb[0].mxu0
  %v381 = vadd.f32 %v286, %v380
  %v382 = vpop.f32.mrb[0].mxu0
  %383 = vmatprep.mubr.bf16.mxu0 0
  %384 = vmatmul.mubr.bf16.gmra.mrb[0].mxu0 %v321
  %v385 = vpop.f32.mrb[0].mxu0
  %v386 = vadd.f32 %v286, %v385
  %v387 = vpop.f32.mrb[0].mxu0
  %v388 = vpop.f32.mrb[0].mxu0
  %v389 = vadd.f32 %v286, %v388
  %v390 = vpop.f32.mrb[0].mxu0
  %391 = vmatprep.mubr.bf16.mxu0 0
  %392 = vmatmul.mubr.bf16.gmra.mrb[0].mxu0 %v322
  %v393 = vpop.f32.mrb[0].mxu0
  %v394 = vadd.f32 %v286, %v393
  %v395 = vpop.f32.mrb[0].mxu0
  %v396 = vpop.f32.mrb[0].mxu0
  %v397 = vadd.f32 %v286, %v396
  %v398 = vpop.f32.mrb[0].mxu0
  %399 = vmatprep.mubr.bf16.mxu0 0
  %400 = vmatmul.mubr.bf16.gmra.mrb[0].mxu0 %v323
  %v401 = vpop.f32.mrb[0].mxu0
  %v402 = vadd.f32 %v286, %v401
  %v403 = vpop.f32.mrb[0].mxu0
  %v404 = vpop.f32.mrb[0].mxu0
  %v405 = vadd.f32 %v286, %v404
  %v406 = vpop.f32.mrb[0].mxu0
  %407 = vmatprep.mubr.bf16.mxu0 0
  %408 = vmatmul.mubr.bf16.gmra.mrb[0].mxu0 %v324
  %v409 = vpop.f32.mrb[0].mxu0
  %v410 = vadd.f32 %v286, %v409
  %v411 = vpop.f32.mrb[0].mxu0
  %v412 = vpop.f32.mrb[0].mxu0
  %v413 = vadd.f32 %v286, %v412
  %v414 = vpop.f32.mrb[0].mxu0
  %415 = vmatprep.mubr.bf16.mxu0 0
  %416 = vmatmul.mubr.bf16.gmra.mrb[0].mxu0 %v325
  %v417 = vpop.f32.mrb[0].mxu0
  %v418 = vadd.f32 %v286, %v417
  %v419 = vpop.f32.mrb[0].mxu0
  %v420 = vpop.f32.mrb[0].mxu0
  %v421 = vadd.f32 %v286, %v420
  %v422 = vpop.f32.mrb[0].mxu0
  %423 = vmatprep.mubr.bf16.mxu0 0
  %424 = vmatmul.mubr.bf16.gmra.mrb[0].mxu0 %v326
  %v425 = vpop.f32.mrb[0].mxu0
  %v426 = vadd.f32 %v286, %v425
  %v427 = vpop.f32.mrb[0].mxu0
  %v428 = vpop.f32.mrb[0].mxu0
  %v429 = vadd.f32 %v286, %v428
  %v430 = vpop.f32.mrb[0].mxu0
  %431 = vdwg.mxu0
  %v432 = vmax.f32 %v370, 0.0
  %v433 = vmax.f32 %v373, 0.0
  %v434 = vmax.f32 %v378, 0.0
  %v435 = vmax.f32 %v381, 0.0
  %v436 = vmax.f32 %v386, 0.0
  %v437 = vmax.f32 %v389, 0.0
  %v438 = vmax.f32 %v394, 0.0
  %v439 = vmax.f32 %v397, 0.0
  %v440 = vmax.f32 %v402, 0.0
  %v441 = vmax.f32 %v405, 0.0
  %v442 = vmax.f32 %v410, 0.0
  %v443 = vmax.f32 %v413, 0.0
  %v444 = vmax.f32 %v418, 0.0
  %v445 = vmax.f32 %v421, 0.0
  %v446 = vmax.f32 %v426, 0.0
  %v447 = vmax.f32 %v429, 0.0
  %v448 = vpack.c.bf16 %v433, %v432
  %v449 = vpack.c.bf16 %v435, %v434
  %v450 = vpack.c.bf16 %v437, %v436
  %v451 = vpack.c.bf16 %v439, %v438
  %v452 = vpack.c.bf16 %v441, %v440
  %v453 = vpack.c.bf16 %v443, %v442
  %v454 = vpack.c.bf16 %v445, %v444
  %v455 = vpack.c.bf16 %v447, %v446
  %v460 = vunpack.c.l.b16 %v52
  %v461 = vunpack.c.l.b16 %v53
  %v462 = vunpack.c.l.b16 %v54
  %v463 = vunpack.c.l.b16 %v55
  %v464 = vpack.c.b16 %v461, %v460
  %v465 = vpack.c.b16 %v463, %v462
  %vm468 = vcmask 261120
  %v470 = vsel %vm468, %v448, 0
  %v473 = vsel %vm468, %v449, 0
  %v476 = vsel %vm468, %v450, 0
  %v479 = vsel %vm468, %v451, 0
  %v482 = vsel %vm468, %v452, 0
  %v485 = vsel %vm468, %v453, 0
  %v488 = vsel %vm468, %v454, 0
  %v491 = vsel %vm468, %v455, 0
  %493 = vmatprep.subr.bf16.mxu0 0
  %494 = vmatpush1.bf16.msra.mxu0 %v464
  %495 = vmatprep.subr.bf16.mxu0 0
  %496 = vmatpush1.bf16.msra.mxu0 %v465
  %497 = vmatprep.subr.bf16.mxu0 0
  %498 = vmatpush1.bf16.msra.mxu0 0
  %499 = vmatprep.subr.bf16.mxu0 0
  %500 = vmatpush1.bf16.msra.mxu0 0
  %501 = vmatprep.subr.bf16.mxu0 0
  %502 = vmatpush1.bf16.msra.mxu0 0
  %503 = vmatprep.subr.bf16.mxu0 0
  %504 = vmatpush1.bf16.msra.mxu0 0
  %505 = vmatprep.subr.bf16.mxu0 0
  %506 = vmatpush1.bf16.msra.mxu0 0
  %507 = vmatprep.subr.bf16.mxu0 0
  %508 = vmatpush1.bf16.msra.mxu0 0
  %509 = vmatprep.subr.bf16.mxu0 0
  %510 = vmatpush1.bf16.msra.mxu0 0
  %511 = vmatprep.subr.bf16.mxu0 0
  %512 = vmatpush1.bf16.msra.mxu0 0
  %513 = vmatprep.subr.bf16.mxu0 0
  %514 = vmatpush1.bf16.msra.mxu0 0
  %515 = vmatprep.subr.bf16.mxu0 0
  %516 = vmatpush1.bf16.msra.mxu0 0
  %517 = vmatprep.subr.bf16.mxu0 0
  %518 = vmatpush1.bf16.msra.mxu0 0
  %519 = vmatprep.subr.bf16.mxu0 0
  %520 = vmatpush1.bf16.msra.mxu0 0
  %521 = vmatprep.subr.bf16.mxu0 0
  %522 = vmatpush1.bf16.msra.mxu0 0
  %523 = vmatprep.subr.bf16.mxu0 0
  %524 = vmatpush1.bf16.msra.mxu0 0
  %525 = vmatprep.mubr.bf16.mxu0 0
  %526 = vmatmul.mubr.bf16.gmra.mrb[0].mxu0 %v470
  %v527 = vpop.f32.mrb[0].mxu0
  %v528 = vadd.f32 0.0, %v527
  %v529 = vpop.f32.mrb[0].mxu0
  %v530 = vpop.f32.mrb[0].mxu0
  %v531 = vadd.f32 0.0, %v530
  %v532 = vpop.f32.mrb[0].mxu0
  %533 = vmatprep.mubr.bf16.mxu0 0
  %534 = vmatmul.mubr.bf16.gmra.mrb[0].mxu0 %v473
  %v535 = vpop.f32.mrb[0].mxu0
  %v536 = vadd.f32 0.0, %v535
  %v537 = vpop.f32.mrb[0].mxu0
  %v538 = vpop.f32.mrb[0].mxu0
  %v539 = vadd.f32 0.0, %v538
  %v540 = vpop.f32.mrb[0].mxu0
  %541 = vmatprep.mubr.bf16.mxu0 0
  %542 = vmatmul.mubr.bf16.gmra.mrb[0].mxu0 %v476
  %v543 = vpop.f32.mrb[0].mxu0
  %v544 = vadd.f32 0.0, %v543
  %v545 = vpop.f32.mrb[0].mxu0
  %v546 = vpop.f32.mrb[0].mxu0
  %v547 = vadd.f32 0.0, %v546
  %v548 = vpop.f32.mrb[0].mxu0
  %549 = vmatprep.mubr.bf16.mxu0 0
  %550 = vmatmul.mubr.bf16.gmra.mrb[0].mxu0 %v479
  %v551 = vpop.f32.mrb[0].mxu0
  %v552 = vadd.f32 0.0, %v551
  %v553 = vpop.f32.mrb[0].mxu0
  %v554 = vpop.f32.mrb[0].mxu0
  %v555 = vadd.f32 0.0, %v554
  %v556 = vpop.f32.mrb[0].mxu0
  %557 = vmatprep.mubr.bf16.mxu0 0
  %558 = vmatmul.mubr.bf16.gmra.mrb[0].mxu0 %v482
  %v559 = vpop.f32.mrb[0].mxu0
  %v560 = vadd.f32 0.0, %v559
  %v561 = vpop.f32.mrb[0].mxu0
  %v562 = vpop.f32.mrb[0].mxu0
  %v563 = vadd.f32 0.0, %v562
  %v564 = vpop.f32.mrb[0].mxu0
  %565 = vmatprep.mubr.bf16.mxu0 0
  %566 = vmatmul.mubr.bf16.gmra.mrb[0].mxu0 %v485
  %v567 = vpop.f32.mrb[0].mxu0
  %v568 = vadd.f32 0.0, %v567
  %v569 = vpop.f32.mrb[0].mxu0
  %v570 = vpop.f32.mrb[0].mxu0
  %v571 = vadd.f32 0.0, %v570
  %v572 = vpop.f32.mrb[0].mxu0
  %573 = vmatprep.mubr.bf16.mxu0 0
  %574 = vmatmul.mubr.bf16.gmra.mrb[0].mxu0 %v488
  %v575 = vpop.f32.mrb[0].mxu0
  %v576 = vadd.f32 0.0, %v575
  %v577 = vpop.f32.mrb[0].mxu0
  %v578 = vpop.f32.mrb[0].mxu0
  %v579 = vadd.f32 0.0, %v578
  %v580 = vpop.f32.mrb[0].mxu0
  %581 = vmatprep.mubr.bf16.mxu0 0
  %582 = vmatmul.mubr.bf16.gmra.mrb[0].mxu0 %v491
  %v583 = vpop.f32.mrb[0].mxu0
  %v584 = vadd.f32 0.0, %v583
  %v585 = vpop.f32.mrb[0].mxu0
  %v586 = vpop.f32.mrb[0].mxu0
  %v587 = vadd.f32 0.0, %v586
  %v588 = vpop.f32.mrb[0].mxu0
  %589 = vdwg.mxu0
  %v590 = vpack.c.bf16 %v531, %v528
  %v591 = vpack.c.bf16 %v539, %v536
  %v592 = vpack.c.bf16 %v547, %v544
  %v593 = vpack.c.bf16 %v555, %v552
  %v594 = vpack.c.bf16 %v563, %v560
  %v595 = vpack.c.bf16 %v571, %v568
  %v596 = vpack.c.bf16 %v579, %v576
  %v597 = vpack.c.bf16 %v587, %v584
  %v598 = vlaneseq
  %v599 = vshrl.u32 %v598, 7
  %v600 = vsub.s32 0, %v599
  %v601 = vrot.slane %v69, %v600
  %602 = vmatprep.subr.bf16.mxu0 0
  %603 = vmatpush1.bf16.msra.mxu0 %v590
  %604 = vmatprep.subr.bf16.mxu0 0
  %605 = vmatpush1.bf16.msra.mxu0 %v591
  %606 = vmatprep.subr.bf16.mxu0 0
  %607 = vmatpush1.bf16.msra.mxu0 %v592
  %608 = vmatprep.subr.bf16.mxu0 0
  %609 = vmatpush1.bf16.msra.mxu0 %v593
  %610 = vmatprep.subr.bf16.mxu0 0
  %611 = vmatpush1.bf16.msra.mxu0 %v594
  %612 = vmatprep.subr.bf16.mxu0 0
  %613 = vmatpush1.bf16.msra.mxu0 %v595
  %614 = vmatprep.subr.bf16.mxu0 0
  %615 = vmatpush1.bf16.msra.mxu0 %v596
  %616 = vmatprep.subr.bf16.mxu0 0
  %617 = vmatpush1.bf16.msra.mxu0 %v597
  %618 = vmatprep.subr.bf16.mxu0 0
  %619 = vmatpush1.bf16.msra.mxu0 0
  %620 = vmatprep.subr.bf16.mxu0 0
  %621 = vmatpush1.bf16.msra.mxu0 0
  %622 = vmatprep.subr.bf16.mxu0 0
  %623 = vmatpush1.bf16.msra.mxu0 0
  %624 = vmatprep.subr.bf16.mxu0 0
  %625 = vmatpush1.bf16.msra.mxu0 0
  %626 = vmatprep.subr.bf16.mxu0 0
  %627 = vmatpush1.bf16.msra.mxu0 0
  %628 = vmatprep.subr.bf16.mxu0 0
  %629 = vmatpush1.bf16.msra.mxu0 0
  %630 = vmatprep.subr.bf16.mxu0 0
  %631 = vmatpush1.bf16.msra.mxu0 0
  %632 = vmatprep.subr.bf16.mxu0 0
  %633 = vmatpush1.bf16.msra.mxu0 0
  %634 = vmatprep.mubr.bf16.mxu0 0
  %635 = vmatmul.mubr.bf16.gmra.mrb[0].mxu0 %v319
  %v636 = vpop.f32.mrb[0].mxu0
  %v637 = vadd.f32 %v601, %v636
  %v638 = vpop.f32.mrb[0].mxu0
  %v639 = vpop.f32.mrb[0].mxu0
  %v640 = vadd.f32 %v601, %v639
  %v641 = vpop.f32.mrb[0].mxu0
  %642 = vmatprep.mubr.bf16.mxu0 0
  %643 = vmatmul.mubr.bf16.gmra.mrb[0].mxu0 %v320
  %v644 = vpop.f32.mrb[0].mxu0
  %v645 = vadd.f32 %v601, %v644
  %v646 = vpop.f32.mrb[0].mxu0
  %v647 = vpop.f32.mrb[0].mxu0
  %v648 = vadd.f32 %v601, %v647
  %v649 = vpop.f32.mrb[0].mxu0
  %650 = vmatprep.mubr.bf16.mxu0 0
  %651 = vmatmul.mubr.bf16.gmra.mrb[0].mxu0 %v321
  %v652 = vpop.f32.mrb[0].mxu0
  %v653 = vadd.f32 %v601, %v652
  %v654 = vpop.f32.mrb[0].mxu0
  %v655 = vpop.f32.mrb[0].mxu0
  %v656 = vadd.f32 %v601, %v655
  %v657 = vpop.f32.mrb[0].mxu0
  %658 = vmatprep.mubr.bf16.mxu0 0
  %659 = vmatmul.mubr.bf16.gmra.mrb[0].mxu0 %v322
  %v660 = vpop.f32.mrb[0].mxu0
  %v661 = vadd.f32 %v601, %v660
  %v662 = vpop.f32.mrb[0].mxu0
  %v663 = vpop.f32.mrb[0].mxu0
  %v664 = vadd.f32 %v601, %v663
  %v665 = vpop.f32.mrb[0].mxu0
  %666 = vmatprep.mubr.bf16.mxu0 0
  %667 = vmatmul.mubr.bf16.gmra.mrb[0].mxu0 %v323
  %v668 = vpop.f32.mrb[0].mxu0
  %v669 = vadd.f32 %v601, %v668
  %v670 = vpop.f32.mrb[0].mxu0
  %v671 = vpop.f32.mrb[0].mxu0
  %v672 = vadd.f32 %v601, %v671
  %v673 = vpop.f32.mrb[0].mxu0
  %674 = vmatprep.mubr.bf16.mxu0 0
  %675 = vmatmul.mubr.bf16.gmra.mrb[0].mxu0 %v324
  %v676 = vpop.f32.mrb[0].mxu0
  %v677 = vadd.f32 %v601, %v676
  %v678 = vpop.f32.mrb[0].mxu0
  %v679 = vpop.f32.mrb[0].mxu0
  %v680 = vadd.f32 %v601, %v679
  %v681 = vpop.f32.mrb[0].mxu0
  %682 = vmatprep.mubr.bf16.mxu0 0
  %683 = vmatmul.mubr.bf16.gmra.mrb[0].mxu0 %v325
  %v684 = vpop.f32.mrb[0].mxu0
  %v685 = vadd.f32 %v601, %v684
  %v686 = vpop.f32.mrb[0].mxu0
  %v687 = vpop.f32.mrb[0].mxu0
  %v688 = vadd.f32 %v601, %v687
  %v689 = vpop.f32.mrb[0].mxu0
  %690 = vmatprep.mubr.bf16.mxu0 0
  %691 = vmatmul.mubr.bf16.gmra.mrb[0].mxu0 %v326
  %v692 = vpop.f32.mrb[0].mxu0
  %v693 = vadd.f32 %v601, %v692
  %v694 = vpop.f32.mrb[0].mxu0
  %v695 = vpop.f32.mrb[0].mxu0
  %v696 = vadd.f32 %v601, %v695
  %v697 = vpop.f32.mrb[0].mxu0
  %698 = vdwg.mxu0
  %v699 = vmax.f32 %v637, 0.0
  %v700 = vmax.f32 %v640, 0.0
  %v701 = vmax.f32 %v645, 0.0
  %v702 = vmax.f32 %v648, 0.0
  %v703 = vmax.f32 %v653, 0.0
  %v704 = vmax.f32 %v656, 0.0
  %v705 = vmax.f32 %v661, 0.0
  %v706 = vmax.f32 %v664, 0.0
  %v707 = vmax.f32 %v669, 0.0
  %v708 = vmax.f32 %v672, 0.0
  %v709 = vmax.f32 %v677, 0.0
  %v710 = vmax.f32 %v680, 0.0
  %v711 = vmax.f32 %v685, 0.0
  %v712 = vmax.f32 %v688, 0.0
  %v713 = vmax.f32 %v693, 0.0
  %v714 = vmax.f32 %v696, 0.0
  %v715 = vpack.c.bf16 %v700, %v699
  %v716 = vpack.c.bf16 %v702, %v701
  %v717 = vpack.c.bf16 %v704, %v703
  %v718 = vpack.c.bf16 %v706, %v705
  %v719 = vpack.c.bf16 %v708, %v707
  %v720 = vpack.c.bf16 %v710, %v709
  %v721 = vpack.c.bf16 %v712, %v711
  %v722 = vpack.c.bf16 %v714, %v713
  %v727 = vunpack.c.l.b16 %v56
  %v728 = vunpack.c.l.b16 %v57
  %v729 = vunpack.c.l.b16 %v58
  %v730 = vunpack.c.l.b16 %v59
  %v731 = vpack.c.b16 %v728, %v727
  %v732 = vpack.c.b16 %v730, %v729
  %v736 = vsel %vm468, %v715, 0
  %v739 = vsel %vm468, %v716, 0
  %v742 = vsel %vm468, %v717, 0
  %v745 = vsel %vm468, %v718, 0
  %v748 = vsel %vm468, %v719, 0
  %v751 = vsel %vm468, %v720, 0
  %v754 = vsel %vm468, %v721, 0
  %v757 = vsel %vm468, %v722, 0
  %759 = vmatprep.subr.bf16.mxu0 0
  %760 = vmatpush1.bf16.msra.mxu0 %v731
  %761 = vmatprep.subr.bf16.mxu0 0
  %762 = vmatpush1.bf16.msra.mxu0 %v732
  %763 = vmatprep.subr.bf16.mxu0 0
  %764 = vmatpush1.bf16.msra.mxu0 0
  %765 = vmatprep.subr.bf16.mxu0 0
  %766 = vmatpush1.bf16.msra.mxu0 0
  %767 = vmatprep.subr.bf16.mxu0 0
  %768 = vmatpush1.bf16.msra.mxu0 0
  %769 = vmatprep.subr.bf16.mxu0 0
  %770 = vmatpush1.bf16.msra.mxu0 0
  %771 = vmatprep.subr.bf16.mxu0 0
  %772 = vmatpush1.bf16.msra.mxu0 0
  %773 = vmatprep.subr.bf16.mxu0 0
  %774 = vmatpush1.bf16.msra.mxu0 0
  %775 = vmatprep.subr.bf16.mxu0 0
  %776 = vmatpush1.bf16.msra.mxu0 0
  %777 = vmatprep.subr.bf16.mxu0 0
  %778 = vmatpush1.bf16.msra.mxu0 0
  %779 = vmatprep.subr.bf16.mxu0 0
  %780 = vmatpush1.bf16.msra.mxu0 0
  %781 = vmatprep.subr.bf16.mxu0 0
  %782 = vmatpush1.bf16.msra.mxu0 0
  %783 = vmatprep.subr.bf16.mxu0 0
  %784 = vmatpush1.bf16.msra.mxu0 0
  %785 = vmatprep.subr.bf16.mxu0 0
  %786 = vmatpush1.bf16.msra.mxu0 0
  %787 = vmatprep.subr.bf16.mxu0 0
  %788 = vmatpush1.bf16.msra.mxu0 0
  %789 = vmatprep.subr.bf16.mxu0 0
  %790 = vmatpush1.bf16.msra.mxu0 0
  %791 = vmatprep.mubr.bf16.mxu0 0
  %792 = vmatmul.mubr.bf16.gmra.mrb[0].mxu0 %v736
  %v793 = vpop.f32.mrb[0].mxu0
  %v794 = vadd.f32 0.0, %v793
  %v795 = vpop.f32.mrb[0].mxu0
  %v796 = vpop.f32.mrb[0].mxu0
  %v797 = vadd.f32 0.0, %v796
  %v798 = vpop.f32.mrb[0].mxu0
  %799 = vmatprep.mubr.bf16.mxu0 0
  %800 = vmatmul.mubr.bf16.gmra.mrb[0].mxu0 %v739
  %v801 = vpop.f32.mrb[0].mxu0
  %v802 = vadd.f32 0.0, %v801
  %v803 = vpop.f32.mrb[0].mxu0
  %v804 = vpop.f32.mrb[0].mxu0
  %v805 = vadd.f32 0.0, %v804
  %v806 = vpop.f32.mrb[0].mxu0
  %807 = vmatprep.mubr.bf16.mxu0 0
  %808 = vmatmul.mubr.bf16.gmra.mrb[0].mxu0 %v742
  %v809 = vpop.f32.mrb[0].mxu0
  %v810 = vadd.f32 0.0, %v809
  %v811 = vpop.f32.mrb[0].mxu0
  %v812 = vpop.f32.mrb[0].mxu0
  %v813 = vadd.f32 0.0, %v812
  %v814 = vpop.f32.mrb[0].mxu0
  %815 = vmatprep.mubr.bf16.mxu0 0
  %816 = vmatmul.mubr.bf16.gmra.mrb[0].mxu0 %v745
  %v817 = vpop.f32.mrb[0].mxu0
  %v818 = vadd.f32 0.0, %v817
  %v819 = vpop.f32.mrb[0].mxu0
  %v820 = vpop.f32.mrb[0].mxu0
  %v821 = vadd.f32 0.0, %v820
  %v822 = vpop.f32.mrb[0].mxu0
  %823 = vmatprep.mubr.bf16.mxu0 0
  %824 = vmatmul.mubr.bf16.gmra.mrb[0].mxu0 %v748
  %v825 = vpop.f32.mrb[0].mxu0
  %v826 = vadd.f32 0.0, %v825
  %v827 = vpop.f32.mrb[0].mxu0
  %v828 = vpop.f32.mrb[0].mxu0
  %v829 = vadd.f32 0.0, %v828
  %v830 = vpop.f32.mrb[0].mxu0
  %831 = vmatprep.mubr.bf16.mxu0 0
  %832 = vmatmul.mubr.bf16.gmra.mrb[0].mxu0 %v751
  %v833 = vpop.f32.mrb[0].mxu0
  %v834 = vadd.f32 0.0, %v833
  %v835 = vpop.f32.mrb[0].mxu0
  %v836 = vpop.f32.mrb[0].mxu0
  %v837 = vadd.f32 0.0, %v836
  %v838 = vpop.f32.mrb[0].mxu0
  %839 = vmatprep.mubr.bf16.mxu0 0
  %840 = vmatmul.mubr.bf16.gmra.mrb[0].mxu0 %v754
  %v841 = vpop.f32.mrb[0].mxu0
  %v842 = vadd.f32 0.0, %v841
  %v843 = vpop.f32.mrb[0].mxu0
  %v844 = vpop.f32.mrb[0].mxu0
  %v845 = vadd.f32 0.0, %v844
  %v846 = vpop.f32.mrb[0].mxu0
  %847 = vmatprep.mubr.bf16.mxu0 0
  %848 = vmatmul.mubr.bf16.gmra.mrb[0].mxu0 %v757
  %v849 = vpop.f32.mrb[0].mxu0
  %v850 = vadd.f32 0.0, %v849
  %v851 = vpop.f32.mrb[0].mxu0
  %v852 = vpop.f32.mrb[0].mxu0
  %v853 = vadd.f32 0.0, %v852
  %v854 = vpop.f32.mrb[0].mxu0
  %855 = vdwg.mxu0
  %v856 = vpack.c.bf16 %v797, %v794
  %v857 = vpack.c.bf16 %v805, %v802
  %v858 = vpack.c.bf16 %v813, %v810
  %v859 = vpack.c.bf16 %v821, %v818
  %v860 = vpack.c.bf16 %v829, %v826
  %v861 = vpack.c.bf16 %v837, %v834
  %v862 = vpack.c.bf16 %v845, %v842
  %v863 = vpack.c.bf16 %v853, %v850
  %v864 = vlaneseq
  %v865 = vshrl.u32 %v864, 7
  %v866 = vsub.s32 0, %v865
  %v867 = vrot.slane %v70, %v866
  %868 = vmatprep.subr.bf16.mxu0 0
  %869 = vmatpush1.bf16.msra.mxu0 %v856
  %870 = vmatprep.subr.bf16.mxu0 0
  %871 = vmatpush1.bf16.msra.mxu0 %v857
  %872 = vmatprep.subr.bf16.mxu0 0
  %873 = vmatpush1.bf16.msra.mxu0 %v858
  %874 = vmatprep.subr.bf16.mxu0 0
  %875 = vmatpush1.bf16.msra.mxu0 %v859
  %876 = vmatprep.subr.bf16.mxu0 0
  %877 = vmatpush1.bf16.msra.mxu0 %v860
  %878 = vmatprep.subr.bf16.mxu0 0
  %879 = vmatpush1.bf16.msra.mxu0 %v861
  %880 = vmatprep.subr.bf16.mxu0 0
  %881 = vmatpush1.bf16.msra.mxu0 %v862
  %882 = vmatprep.subr.bf16.mxu0 0
  %883 = vmatpush1.bf16.msra.mxu0 %v863
  %884 = vmatprep.subr.bf16.mxu0 0
  %885 = vmatpush1.bf16.msra.mxu0 0
  %886 = vmatprep.subr.bf16.mxu0 0
  %887 = vmatpush1.bf16.msra.mxu0 0
  %888 = vmatprep.subr.bf16.mxu0 0
  %889 = vmatpush1.bf16.msra.mxu0 0
  %890 = vmatprep.subr.bf16.mxu0 0
  %891 = vmatpush1.bf16.msra.mxu0 0
  %892 = vmatprep.subr.bf16.mxu0 0
  %893 = vmatpush1.bf16.msra.mxu0 0
  %894 = vmatprep.subr.bf16.mxu0 0
  %895 = vmatpush1.bf16.msra.mxu0 0
  %896 = vmatprep.subr.bf16.mxu0 0
  %897 = vmatpush1.bf16.msra.mxu0 0
  %898 = vmatprep.subr.bf16.mxu0 0
  %899 = vmatpush1.bf16.msra.mxu0 0
  %900 = vmatprep.mubr.bf16.mxu0 0
  %901 = vmatmul.mubr.bf16.gmra.mrb[0].mxu0 %v319
  %v902 = vpop.f32.mrb[0].mxu0
  %v903 = vadd.f32 %v867, %v902
  %v904 = vpop.f32.mrb[0].mxu0
  %v905 = vpop.f32.mrb[0].mxu0
  %v906 = vadd.f32 %v867, %v905
  %v907 = vpop.f32.mrb[0].mxu0
  %908 = vmatprep.mubr.bf16.mxu0 0
  %909 = vmatmul.mubr.bf16.gmra.mrb[0].mxu0 %v320
  %v910 = vpop.f32.mrb[0].mxu0
  %v911 = vadd.f32 %v867, %v910
  %v912 = vpop.f32.mrb[0].mxu0
  %v913 = vpop.f32.mrb[0].mxu0
  %v914 = vadd.f32 %v867, %v913
  %v915 = vpop.f32.mrb[0].mxu0
  %916 = vmatprep.mubr.bf16.mxu0 0
  %917 = vmatmul.mubr.bf16.gmra.mrb[0].mxu0 %v321
  %v918 = vpop.f32.mrb[0].mxu0
  %v919 = vadd.f32 %v867, %v918
  %v920 = vpop.f32.mrb[0].mxu0
  %v921 = vpop.f32.mrb[0].mxu0
  %v922 = vadd.f32 %v867, %v921
  %v923 = vpop.f32.mrb[0].mxu0
  %924 = vmatprep.mubr.bf16.mxu0 0
  %925 = vmatmul.mubr.bf16.gmra.mrb[0].mxu0 %v322
  %v926 = vpop.f32.mrb[0].mxu0
  %v927 = vadd.f32 %v867, %v926
  %v928 = vpop.f32.mrb[0].mxu0
  %v929 = vpop.f32.mrb[0].mxu0
  %v930 = vadd.f32 %v867, %v929
  %v931 = vpop.f32.mrb[0].mxu0
  %932 = vmatprep.mubr.bf16.mxu0 0
  %933 = vmatmul.mubr.bf16.gmra.mrb[0].mxu0 %v323
  %v934 = vpop.f32.mrb[0].mxu0
  %v935 = vadd.f32 %v867, %v934
  %v936 = vpop.f32.mrb[0].mxu0
  %v937 = vpop.f32.mrb[0].mxu0
  %v938 = vadd.f32 %v867, %v937
  %v939 = vpop.f32.mrb[0].mxu0
  %940 = vmatprep.mubr.bf16.mxu0 0
  %941 = vmatmul.mubr.bf16.gmra.mrb[0].mxu0 %v324
  %v942 = vpop.f32.mrb[0].mxu0
  %v943 = vadd.f32 %v867, %v942
  %v944 = vpop.f32.mrb[0].mxu0
  %v945 = vpop.f32.mrb[0].mxu0
  %v946 = vadd.f32 %v867, %v945
  %v947 = vpop.f32.mrb[0].mxu0
  %948 = vmatprep.mubr.bf16.mxu0 0
  %949 = vmatmul.mubr.bf16.gmra.mrb[0].mxu0 %v325
  %v950 = vpop.f32.mrb[0].mxu0
  %v951 = vadd.f32 %v867, %v950
  %v952 = vpop.f32.mrb[0].mxu0
  %v953 = vpop.f32.mrb[0].mxu0
  %v954 = vadd.f32 %v867, %v953
  %v955 = vpop.f32.mrb[0].mxu0
  %956 = vmatprep.mubr.bf16.mxu0 0
  %957 = vmatmul.mubr.bf16.gmra.mrb[0].mxu0 %v326
  %v958 = vpop.f32.mrb[0].mxu0
  %v959 = vadd.f32 %v867, %v958
  %v960 = vpop.f32.mrb[0].mxu0
  %v961 = vpop.f32.mrb[0].mxu0
  %v962 = vadd.f32 %v867, %v961
  %v963 = vpop.f32.mrb[0].mxu0
  %964 = vdwg.mxu0
  %v965 = vlaneseq
  %v966 = vand.u32 %v965, 127
  %v967 = vld [vmem:[%s2] sm:$0xff]
  %v968 = vld [vmem:[%s2 + $0x8] sm:$0xff]
  %v969 = vld [vmem:[%s2 + $0x10] sm:$0xff]
  %v970 = vld [vmem:[%s2 + $0x18] sm:$0xff]
  %v971 = vld [vmem:[%s2 + $0x20] sm:$0xff]
  %v972 = vld [vmem:[%s2 + $0x28] sm:$0xff]
  %v973 = vld [vmem:[%s2 + $0x30] sm:$0xff]
  %v974 = vld [vmem:[%s2 + $0x38] sm:$0xff]
  %v975 = vld [vmem:[%s2 + $0x40] sm:$0xff]
  %v976 = vld [vmem:[%s2 + $0x48] sm:$0xff]
  %v977 = vld [vmem:[%s2 + $0x50] sm:$0xff]
  %v978 = vld [vmem:[%s2 + $0x58] sm:$0xff]
  %v979 = vld [vmem:[%s2 + $0x60] sm:$0xff]
  %v980 = vld [vmem:[%s2 + $0x68] sm:$0xff]
  %v981 = vld [vmem:[%s2 + $0x70] sm:$0xff]
  %v982 = vld [vmem:[%s2 + $0x78] sm:$0xff]
  %v983 = vld [vmem:[%s2 + $0x80] sm:$0xff]
  %v984 = vld [vmem:[%s2 + $0x88] sm:$0xff]
  %v985 = vld [vmem:[%s2 + $0x90] sm:$0xff]
  %v986 = vld [vmem:[%s2 + $0x98] sm:$0xff]
  %v987 = vld [vmem:[%s2 + $0xa0] sm:$0xff]
  %v988 = vld [vmem:[%s2 + $0xa8] sm:$0xff]
  %v989 = vld [vmem:[%s2 + $0xb0] sm:$0xff]
  %v990 = vld [vmem:[%s2 + $0xb8] sm:$0xff]
  %v991 = vld [vmem:[%s2 + $0xc0] sm:$0xff]
  %v992 = vld [vmem:[%s2 + $0xc8] sm:$0xff]
  %v993 = vld [vmem:[%s2 + $0xd0] sm:$0xff]
  %v994 = vld [vmem:[%s2 + $0xd8] sm:$0xff]
  %v995 = vld [vmem:[%s2 + $0xe0] sm:$0xff]
  %v996 = vld [vmem:[%s2 + $0xe8] sm:$0xff]
  %v997 = vld [vmem:[%s2 + $0xf0] sm:$0xff]
  %v998 = vld [vmem:[%s2 + $0xf8] sm:$0xff]
  %v999 = vld [vmem:[%s2 + $0x100] sm:$0xff]
  %v1000 = vld [vmem:[%s2 + $0x108] sm:$0xff]
  %v1001 = vld [vmem:[%s2 + $0x110] sm:$0xff]
  %v1002 = vld [vmem:[%s2 + $0x118] sm:$0xff]
  %v1003 = vld [vmem:[%s2 + $0x120] sm:$0xff]
  %v1004 = vld [vmem:[%s2 + $0x128] sm:$0xff]
  %v1005 = vld [vmem:[%s2 + $0x130] sm:$0xff]
  %v1006 = vld [vmem:[%s2 + $0x138] sm:$0xff]
  %1007 = vset.pattern.permute.xlu0 0
  %1008 = vperm.xlu0 %1007, %v967
  %v1009 = vpop.permute.xlu0 %1008
  %1010 = vset.pattern.permute.xlu0 0
  %1011 = vperm.xlu0 %1010, %v968
  %v1012 = vpop.permute.xlu0 %1011
  %1013 = vset.pattern.permute.xlu0 0
  %1014 = vperm.xlu0 %1013, %v969
  %v1015 = vpop.permute.xlu0 %1014
  %1016 = vset.pattern.permute.xlu0 0
  %1017 = vperm.xlu0 %1016, %v970
  %v1018 = vpop.permute.xlu0 %1017
  %1019 = vset.pattern.permute.xlu0 0
  %1020 = vperm.xlu0 %1019, %v971
  %v1021 = vpop.permute.xlu0 %1020
  %1022 = vset.pattern.permute.xlu0 0
  %1023 = vperm.xlu0 %1022, %v972
  %v1024 = vpop.permute.xlu0 %1023
  %1025 = vset.pattern.permute.xlu0 0
  %1026 = vperm.xlu0 %1025, %v973
  %v1027 = vpop.permute.xlu0 %1026
  %1028 = vset.pattern.permute.xlu0 0
  %1029 = vperm.xlu0 %1028, %v974
  %v1030 = vpop.permute.xlu0 %1029
  %1031 = vset.pattern.permute.xlu0 0
  %1032 = vperm.xlu0 %1031, %v975
  %v1033 = vpop.permute.xlu0 %1032
  %1034 = vset.pattern.permute.xlu0 0
  %1035 = vperm.xlu0 %1034, %v976
  %v1036 = vpop.permute.xlu0 %1035
  %1037 = vset.pattern.permute.xlu0 0
  %1038 = vperm.xlu0 %1037, %v977
  %v1039 = vpop.permute.xlu0 %1038
  %1040 = vset.pattern.permute.xlu0 0
  %1041 = vperm.xlu0 %1040, %v978
  %v1042 = vpop.permute.xlu0 %1041
  %1043 = vset.pattern.permute.xlu0 0
  %1044 = vperm.xlu0 %1043, %v979
  %v1045 = vpop.permute.xlu0 %1044
  %1046 = vset.pattern.permute.xlu0 0
  %1047 = vperm.xlu0 %1046, %v980
  %v1048 = vpop.permute.xlu0 %1047
  %1049 = vset.pattern.permute.xlu0 0
  %1050 = vperm.xlu0 %1049, %v981
  %v1051 = vpop.permute.xlu0 %1050
  %1052 = vset.pattern.permute.xlu0 0
  %1053 = vperm.xlu0 %1052, %v982
  %v1054 = vpop.permute.xlu0 %1053
  %1055 = vset.pattern.permute.xlu0 0
  %1056 = vperm.xlu0 %1055, %v983
  %v1057 = vpop.permute.xlu0 %1056
  %1058 = vset.pattern.permute.xlu0 0
  %1059 = vperm.xlu0 %1058, %v984
  %v1060 = vpop.permute.xlu0 %1059
  %1061 = vset.pattern.permute.xlu0 0
  %1062 = vperm.xlu0 %1061, %v985
  %v1063 = vpop.permute.xlu0 %1062
  %1064 = vset.pattern.permute.xlu0 0
  %1065 = vperm.xlu0 %1064, %v986
  %v1066 = vpop.permute.xlu0 %1065
  %1067 = vset.pattern.permute.xlu0 0
  %1068 = vperm.xlu0 %1067, %v987
  %v1069 = vpop.permute.xlu0 %1068
  %1070 = vset.pattern.permute.xlu0 0
  %1071 = vperm.xlu0 %1070, %v988
  %v1072 = vpop.permute.xlu0 %1071
  %1073 = vset.pattern.permute.xlu0 0
  %1074 = vperm.xlu0 %1073, %v989
  %v1075 = vpop.permute.xlu0 %1074
  %1076 = vset.pattern.permute.xlu0 0
  %1077 = vperm.xlu0 %1076, %v990
  %v1078 = vpop.permute.xlu0 %1077
  %1079 = vset.pattern.permute.xlu0 0
  %1080 = vperm.xlu0 %1079, %v991
  %v1081 = vpop.permute.xlu0 %1080
  %1082 = vset.pattern.permute.xlu0 0
  %1083 = vperm.xlu0 %1082, %v992
  %v1084 = vpop.permute.xlu0 %1083
  %1085 = vset.pattern.permute.xlu0 0
  %1086 = vperm.xlu0 %1085, %v993
  %v1087 = vpop.permute.xlu0 %1086
  %1088 = vset.pattern.permute.xlu0 0
  %1089 = vperm.xlu0 %1088, %v994
  %v1090 = vpop.permute.xlu0 %1089
  %1091 = vset.pattern.permute.xlu0 0
  %1092 = vperm.xlu0 %1091, %v995
  %v1093 = vpop.permute.xlu0 %1092
  %1094 = vset.pattern.permute.xlu0 0
  %1095 = vperm.xlu0 %1094, %v996
  %v1096 = vpop.permute.xlu0 %1095
  %1097 = vset.pattern.permute.xlu0 0
  %1098 = vperm.xlu0 %1097, %v997
  %v1099 = vpop.permute.xlu0 %1098
  %1100 = vset.pattern.permute.xlu0 0
  %1101 = vperm.xlu0 %1100, %v998
  %v1102 = vpop.permute.xlu0 %1101
  %1103 = vset.pattern.permute.xlu0 0
  %1104 = vperm.xlu0 %1103, %v999
  %v1105 = vpop.permute.xlu0 %1104
  %1106 = vset.pattern.permute.xlu0 0
  %1107 = vperm.xlu0 %1106, %v1000
  %v1108 = vpop.permute.xlu0 %1107
  %1109 = vset.pattern.permute.xlu0 0
  %1110 = vperm.xlu0 %1109, %v1001
  %v1111 = vpop.permute.xlu0 %1110
  %1112 = vset.pattern.permute.xlu0 0
  %1113 = vperm.xlu0 %1112, %v1002
  %v1114 = vpop.permute.xlu0 %1113
  %1115 = vset.pattern.permute.xlu0 0
  %1116 = vperm.xlu0 %1115, %v1003
  %v1117 = vpop.permute.xlu0 %1116
  %1118 = vset.pattern.permute.xlu0 0
  %1119 = vperm.xlu0 %1118, %v1004
  %v1120 = vpop.permute.xlu0 %1119
  %1121 = vset.pattern.permute.xlu0 0
  %1122 = vperm.xlu0 %1121, %v1005
  %v1123 = vpop.permute.xlu0 %1122
  %1124 = vset.pattern.permute.xlu0 0
  %1125 = vperm.xlu0 %1124, %v1006
  %v1126 = vpop.permute.xlu0 %1125
  %vm1127 = vcmp.eq.s32.totalorder %v966, %v1009
  %vm1128 = vcmp.eq.s32.totalorder %v966, %v1012
  %vm1129 = vcmp.eq.s32.totalorder %v966, %v1015
  %vm1130 = vcmp.eq.s32.totalorder %v966, %v1018
  %vm1131 = vcmp.eq.s32.totalorder %v966, %v1021
  %vm1132 = vcmp.eq.s32.totalorder %v966, %v1024
  %vm1133 = vcmp.eq.s32.totalorder %v966, %v1027
  %vm1134 = vcmp.eq.s32.totalorder %v966, %v1030
  %vm1135 = vcmp.eq.s32.totalorder %v966, %v1033
  %vm1136 = vcmp.eq.s32.totalorder %v966, %v1036
  %vm1137 = vcmp.eq.s32.totalorder %v966, %v1039
  %vm1138 = vcmp.eq.s32.totalorder %v966, %v1042
  %vm1139 = vcmp.eq.s32.totalorder %v966, %v1045
  %vm1140 = vcmp.eq.s32.totalorder %v966, %v1048
  %vm1141 = vcmp.eq.s32.totalorder %v966, %v1051
  %vm1142 = vcmp.eq.s32.totalorder %v966, %v1054
  %vm1143 = vcmp.eq.s32.totalorder %v966, %v1057
  %vm1144 = vcmp.eq.s32.totalorder %v966, %v1060
  %vm1145 = vcmp.eq.s32.totalorder %v966, %v1063
  %vm1146 = vcmp.eq.s32.totalorder %v966, %v1066
  %vm1147 = vcmp.eq.s32.totalorder %v966, %v1069
  %vm1148 = vcmp.eq.s32.totalorder %v966, %v1072
  %vm1149 = vcmp.eq.s32.totalorder %v966, %v1075
  %vm1150 = vcmp.eq.s32.totalorder %v966, %v1078
  %vm1151 = vcmp.eq.s32.totalorder %v966, %v1081
  %vm1152 = vcmp.eq.s32.totalorder %v966, %v1084
  %vm1153 = vcmp.eq.s32.totalorder %v966, %v1087
  %vm1154 = vcmp.eq.s32.totalorder %v966, %v1090
  %vm1155 = vcmp.eq.s32.totalorder %v966, %v1093
  %vm1156 = vcmp.eq.s32.totalorder %v966, %v1096
  %vm1157 = vcmp.eq.s32.totalorder %v966, %v1099
  %vm1158 = vcmp.eq.s32.totalorder %v966, %v1102
  %vm1159 = vcmp.eq.s32.totalorder %v966, %v1105
  %vm1160 = vcmp.eq.s32.totalorder %v966, %v1108
  %vm1161 = vcmp.eq.s32.totalorder %v966, %v1111
  %vm1162 = vcmp.eq.s32.totalorder %v966, %v1114
  %vm1163 = vcmp.eq.s32.totalorder %v966, %v1117
  %vm1164 = vcmp.eq.s32.totalorder %v966, %v1120
  %vm1165 = vcmp.eq.s32.totalorder %v966, %v1123
  %vm1166 = vcmp.eq.s32.totalorder %v966, %v1126
  %v1167 = vsel %vm1127, 1, 0
  %v1168 = vsel %vm1128, 1, 0
  %v1169 = vsel %vm1129, 1, 0
  %v1170 = vsel %vm1130, 1, 0
  %v1171 = vsel %vm1131, 1, 0
  %v1172 = vsel %vm1132, 1, 0
  %v1173 = vsel %vm1133, 1, 0
  %v1174 = vsel %vm1134, 1, 0
  %v1175 = vsel %vm1135, 1, 0
  %v1176 = vsel %vm1136, 1, 0
  %v1177 = vsel %vm1137, 1, 0
  %v1178 = vsel %vm1138, 1, 0
  %v1179 = vsel %vm1139, 1, 0
  %v1180 = vsel %vm1140, 1, 0
  %v1181 = vsel %vm1141, 1, 0
  %v1182 = vsel %vm1142, 1, 0
  %v1183 = vsel %vm1143, 1, 0
  %v1184 = vsel %vm1144, 1, 0
  %v1185 = vsel %vm1145, 1, 0
  %v1186 = vsel %vm1146, 1, 0
  %v1187 = vsel %vm1147, 1, 0
  %v1188 = vsel %vm1148, 1, 0
  %v1189 = vsel %vm1149, 1, 0
  %v1190 = vsel %vm1150, 1, 0
  %v1191 = vsel %vm1151, 1, 0
  %v1192 = vsel %vm1152, 1, 0
  %v1193 = vsel %vm1153, 1, 0
  %v1194 = vsel %vm1154, 1, 0
  %v1195 = vsel %vm1155, 1, 0
  %v1196 = vsel %vm1156, 1, 0
  %v1197 = vsel %vm1157, 1, 0
  %v1198 = vsel %vm1158, 1, 0
  %v1199 = vsel %vm1159, 1, 0
  %v1200 = vsel %vm1160, 1, 0
  %v1201 = vsel %vm1161, 1, 0
  %v1202 = vsel %vm1162, 1, 0
  %v1203 = vsel %vm1163, 1, 0
  %v1204 = vsel %vm1164, 1, 0
  %v1205 = vsel %vm1165, 1, 0
  %v1206 = vsel %vm1166, 1, 0
  %v1207 = vcvt.s32.f32 %v1167
  %v1208 = vcvt.s32.f32 %v1168
  %v1209 = vcvt.s32.f32 %v1169
  %v1210 = vcvt.s32.f32 %v1170
  %v1211 = vcvt.s32.f32 %v1171
  %v1212 = vcvt.s32.f32 %v1172
  %v1213 = vcvt.s32.f32 %v1173
  %v1214 = vcvt.s32.f32 %v1174
  %v1215 = vcvt.s32.f32 %v1175
  %v1216 = vcvt.s32.f32 %v1176
  %v1217 = vcvt.s32.f32 %v1177
  %v1218 = vcvt.s32.f32 %v1178
  %v1219 = vcvt.s32.f32 %v1179
  %v1220 = vcvt.s32.f32 %v1180
  %v1221 = vcvt.s32.f32 %v1181
  %v1222 = vcvt.s32.f32 %v1182
  %v1223 = vcvt.s32.f32 %v1183
  %v1224 = vcvt.s32.f32 %v1184
  %v1225 = vcvt.s32.f32 %v1185
  %v1226 = vcvt.s32.f32 %v1186
  %v1227 = vcvt.s32.f32 %v1187
  %v1228 = vcvt.s32.f32 %v1188
  %v1229 = vcvt.s32.f32 %v1189
  %v1230 = vcvt.s32.f32 %v1190
  %v1231 = vcvt.s32.f32 %v1191
  %v1232 = vcvt.s32.f32 %v1192
  %v1233 = vcvt.s32.f32 %v1193
  %v1234 = vcvt.s32.f32 %v1194
  %v1235 = vcvt.s32.f32 %v1195
  %v1236 = vcvt.s32.f32 %v1196
  %v1237 = vcvt.s32.f32 %v1197
  %v1238 = vcvt.s32.f32 %v1198
  %v1239 = vcvt.s32.f32 %v1199
  %v1240 = vcvt.s32.f32 %v1200
  %v1241 = vcvt.s32.f32 %v1201
  %v1242 = vcvt.s32.f32 %v1202
  %v1243 = vcvt.s32.f32 %v1203
  %v1244 = vcvt.s32.f32 %v1204
  %v1245 = vcvt.s32.f32 %v1205
  %v1246 = vcvt.s32.f32 %v1206
  %1247 = vmatprep.subr.mxu0 0.0
  %1248 = vmatpush1.msra.mxu0 %v903
  %1249 = vmatprep.subr.mxu0 0.0
  %1250 = vmatpush1.msra.mxu0 %v906
  %1251 = vmatprep.subr.mxu0 0.0
  %1252 = vmatpush1.msra.mxu0 %v911
  %1253 = vmatprep.subr.mxu0 0.0
  %1254 = vmatpush1.msra.mxu0 %v914
  %1255 = vmatprep.subr.mxu0 0.0
  %1256 = vmatpush1.msra.mxu0 %v919
  %1257 = vmatprep.subr.mxu0 0.0
  %1258 = vmatpush1.msra.mxu0 %v922
  %1259 = vmatprep.subr.mxu0 0.0
  %1260 = vmatpush1.msra.mxu0 %v927
  %1261 = vmatprep.subr.mxu0 0.0
  %1262 = vmatpush1.msra.mxu0 %v930
  %1263 = vmatprep.subr.mxu0 0.0
  %1264 = vmatpush1.msra.mxu0 %v935
  %1265 = vmatprep.subr.mxu0 0.0
  %1266 = vmatpush1.msra.mxu0 %v938
  %1267 = vmatprep.subr.mxu0 0.0
  %1268 = vmatpush1.msra.mxu0 %v943
  %1269 = vmatprep.subr.mxu0 0.0
  %1270 = vmatpush1.msra.mxu0 %v946
  %1271 = vmatprep.subr.mxu0 0.0
  %1272 = vmatpush1.msra.mxu0 %v951
  %1273 = vmatprep.subr.mxu0 0.0
  %1274 = vmatpush1.msra.mxu0 %v954
  %1275 = vmatprep.subr.mxu0 0.0
  %1276 = vmatpush1.msra.mxu0 %v959
  %1277 = vmatprep.subr.mxu0 0.0
  %1278 = vmatpush1.msra.mxu0 %v962
  %1279 = vmatprep.subr.mxu0 0.0
  %1280 = vmatpush1.msra.mxu0 0.0
  %1281 = vmatprep.subr.mxu0 0.0
  %1282 = vmatpush1.msra.mxu0 0.0
  %1283 = vmatprep.subr.mxu0 0.0
  %1284 = vmatpush1.msra.mxu0 0.0
  %1285 = vmatprep.subr.mxu0 0.0
  %1286 = vmatpush1.msra.mxu0 0.0
  %1287 = vmatprep.subr.mxu0 0.0
  %1288 = vmatpush1.msra.mxu0 0.0
  %1289 = vmatprep.subr.mxu0 0.0
  %1290 = vmatpush1.msra.mxu0 0.0
  %1291 = vmatprep.subr.mxu0 0.0
  %1292 = vmatpush1.msra.mxu0 0.0
  %1293 = vmatprep.subr.mxu0 0.0
  %1294 = vmatpush1.msra.mxu0 0.0
  %1295 = vmatprep.subr.mxu0 0.0
  %1296 = vmatpush1.msra.mxu0 0.0
  %1297 = vmatprep.subr.mxu0 0.0
  %1298 = vmatpush1.msra.mxu0 0.0
  %1299 = vmatprep.subr.mxu0 0.0
  %1300 = vmatpush1.msra.mxu0 0.0
  %1301 = vmatprep.subr.mxu0 0.0
  %1302 = vmatpush1.msra.mxu0 0.0
  %1303 = vmatprep.subr.mxu0 0.0
  %1304 = vmatpush1.msra.mxu0 0.0
  %1305 = vmatprep.subr.mxu0 0.0
  %1306 = vmatpush1.msra.mxu0 0.0
  %1307 = vmatprep.subr.mxu0 0.0
  %1308 = vmatpush1.msra.mxu0 0.0
  %1309 = vmatprep.subr.mxu0 0.0
  %1310 = vmatpush1.msra.mxu0 0.0
  %1311 = vmatprep.mubr.f32.mxu0 0.0
  %1312 = vmatmul.mubr.f32.gmra.mrb[0].mxu0 %v1207
  %v1313 = vpop.f32.mrb[0].mxu0
  %v1314 = vadd.f32 0.0, %v1313
  %v1315 = vpop.f32.mrb[0].mxu0
  %1316 = vmatprep.mubr.f32.mxu0 0.0
  %1317 = vmatmul.mubr.f32.gmra.mrb[0].mxu0 %v1208
  %v1318 = vpop.f32.mrb[0].mxu0
  %v1319 = vadd.f32 0.0, %v1318
  %v1320 = vpop.f32.mrb[0].mxu0
  %1321 = vmatprep.mubr.f32.mxu0 0.0
  %1322 = vmatmul.mubr.f32.gmra.mrb[0].mxu0 %v1209
  %v1323 = vpop.f32.mrb[0].mxu0
  %v1324 = vadd.f32 0.0, %v1323
  %v1325 = vpop.f32.mrb[0].mxu0
  %1326 = vmatprep.mubr.f32.mxu0 0.0
  %1327 = vmatmul.mubr.f32.gmra.mrb[0].mxu0 %v1210
  %v1328 = vpop.f32.mrb[0].mxu0
  %v1329 = vadd.f32 0.0, %v1328
  %v1330 = vpop.f32.mrb[0].mxu0
  %1331 = vmatprep.mubr.f32.mxu0 0.0
  %1332 = vmatmul.mubr.f32.gmra.mrb[0].mxu0 %v1211
  %v1333 = vpop.f32.mrb[0].mxu0
  %v1334 = vadd.f32 0.0, %v1333
  %v1335 = vpop.f32.mrb[0].mxu0
  %1336 = vmatprep.mubr.f32.mxu0 0.0
  %1337 = vmatmul.mubr.f32.gmra.mrb[0].mxu0 %v1212
  %v1338 = vpop.f32.mrb[0].mxu0
  %v1339 = vadd.f32 0.0, %v1338
  %v1340 = vpop.f32.mrb[0].mxu0
  %1341 = vmatprep.mubr.f32.mxu0 0.0
  %1342 = vmatmul.mubr.f32.gmra.mrb[0].mxu0 %v1213
  %v1343 = vpop.f32.mrb[0].mxu0
  %v1344 = vadd.f32 0.0, %v1343
  %v1345 = vpop.f32.mrb[0].mxu0
  %1346 = vmatprep.mubr.f32.mxu0 0.0
  %1347 = vmatmul.mubr.f32.gmra.mrb[0].mxu0 %v1214
  %v1348 = vpop.f32.mrb[0].mxu0
  %v1349 = vadd.f32 0.0, %v1348
  %v1350 = vpop.f32.mrb[0].mxu0
  %1351 = vmatprep.mubr.f32.mxu0 0.0
  %1352 = vmatmul.mubr.f32.gmra.mrb[0].mxu0 %v1215
  %v1353 = vpop.f32.mrb[0].mxu0
  %v1354 = vadd.f32 0.0, %v1353
  %v1355 = vpop.f32.mrb[0].mxu0
  %1356 = vmatprep.mubr.f32.mxu0 0.0
  %1357 = vmatmul.mubr.f32.gmra.mrb[0].mxu0 %v1216
  %v1358 = vpop.f32.mrb[0].mxu0
  %v1359 = vadd.f32 0.0, %v1358
  %v1360 = vpop.f32.mrb[0].mxu0
  %1361 = vmatprep.mubr.f32.mxu0 0.0
  %1362 = vmatmul.mubr.f32.gmra.mrb[0].mxu0 %v1217
  %v1363 = vpop.f32.mrb[0].mxu0
  %v1364 = vadd.f32 0.0, %v1363
  %v1365 = vpop.f32.mrb[0].mxu0
  %1366 = vmatprep.mubr.f32.mxu0 0.0
  %1367 = vmatmul.mubr.f32.gmra.mrb[0].mxu0 %v1218
  %v1368 = vpop.f32.mrb[0].mxu0
  %v1369 = vadd.f32 0.0, %v1368
  %v1370 = vpop.f32.mrb[0].mxu0
  %1371 = vmatprep.mubr.f32.mxu0 0.0
  %1372 = vmatmul.mubr.f32.gmra.mrb[0].mxu0 %v1219
  %v1373 = vpop.f32.mrb[0].mxu0
  %v1374 = vadd.f32 0.0, %v1373
  %v1375 = vpop.f32.mrb[0].mxu0
  %1376 = vmatprep.mubr.f32.mxu0 0.0
  %1377 = vmatmul.mubr.f32.gmra.mrb[0].mxu0 %v1220
  %v1378 = vpop.f32.mrb[0].mxu0
  %v1379 = vadd.f32 0.0, %v1378
  %v1380 = vpop.f32.mrb[0].mxu0
  %1381 = vmatprep.mubr.f32.mxu0 0.0
  %1382 = vmatmul.mubr.f32.gmra.mrb[0].mxu0 %v1221
  %v1383 = vpop.f32.mrb[0].mxu0
  %v1384 = vadd.f32 0.0, %v1383
  %v1385 = vpop.f32.mrb[0].mxu0
  %1386 = vmatprep.mubr.f32.mxu0 0.0
  %1387 = vmatmul.mubr.f32.gmra.mrb[0].mxu0 %v1222
  %v1388 = vpop.f32.mrb[0].mxu0
  %v1389 = vadd.f32 0.0, %v1388
  %v1390 = vpop.f32.mrb[0].mxu0
  %1391 = vmatprep.mubr.f32.mxu0 0.0
  %1392 = vmatmul.mubr.f32.gmra.mrb[0].mxu0 %v1223
  %v1393 = vpop.f32.mrb[0].mxu0
  %v1394 = vadd.f32 0.0, %v1393
  %v1395 = vpop.f32.mrb[0].mxu0
  %1396 = vmatprep.mubr.f32.mxu0 0.0
  %1397 = vmatmul.mubr.f32.gmra.mrb[0].mxu0 %v1224
  %v1398 = vpop.f32.mrb[0].mxu0
  %v1399 = vadd.f32 0.0, %v1398
  %v1400 = vpop.f32.mrb[0].mxu0
  %1401 = vmatprep.mubr.f32.mxu0 0.0
  %1402 = vmatmul.mubr.f32.gmra.mrb[0].mxu0 %v1225
  %v1403 = vpop.f32.mrb[0].mxu0
  %v1404 = vadd.f32 0.0, %v1403
  %v1405 = vpop.f32.mrb[0].mxu0
  %1406 = vmatprep.mubr.f32.mxu0 0.0
  %1407 = vmatmul.mubr.f32.gmra.mrb[0].mxu0 %v1226
  %v1408 = vpop.f32.mrb[0].mxu0
  %v1409 = vadd.f32 0.0, %v1408
  %v1410 = vpop.f32.mrb[0].mxu0
  %1411 = vmatprep.mubr.f32.mxu0 0.0
  %1412 = vmatmul.mubr.f32.gmra.mrb[0].mxu0 %v1227
  %v1413 = vpop.f32.mrb[0].mxu0
  %v1414 = vadd.f32 0.0, %v1413
  %v1415 = vpop.f32.mrb[0].mxu0
  %1416 = vmatprep.mubr.f32.mxu0 0.0
  %1417 = vmatmul.mubr.f32.gmra.mrb[0].mxu0 %v1228
  %v1418 = vpop.f32.mrb[0].mxu0
  %v1419 = vadd.f32 0.0, %v1418
  %v1420 = vpop.f32.mrb[0].mxu0
  %1421 = vmatprep.mubr.f32.mxu0 0.0
  %1422 = vmatmul.mubr.f32.gmra.mrb[0].mxu0 %v1229
  %v1423 = vpop.f32.mrb[0].mxu0
  %v1424 = vadd.f32 0.0, %v1423
  %v1425 = vpop.f32.mrb[0].mxu0
  %1426 = vmatprep.mubr.f32.mxu0 0.0
  %1427 = vmatmul.mubr.f32.gmra.mrb[0].mxu0 %v1230
  %v1428 = vpop.f32.mrb[0].mxu0
  %v1429 = vadd.f32 0.0, %v1428
  %v1430 = vpop.f32.mrb[0].mxu0
  %1431 = vmatprep.mubr.f32.mxu0 0.0
  %1432 = vmatmul.mubr.f32.gmra.mrb[0].mxu0 %v1231
  %v1433 = vpop.f32.mrb[0].mxu0
  %v1434 = vadd.f32 0.0, %v1433
  %v1435 = vpop.f32.mrb[0].mxu0
  %1436 = vmatprep.mubr.f32.mxu0 0.0
  %1437 = vmatmul.mubr.f32.gmra.mrb[0].mxu0 %v1232
  %v1438 = vpop.f32.mrb[0].mxu0
  %v1439 = vadd.f32 0.0, %v1438
  %v1440 = vpop.f32.mrb[0].mxu0
  %1441 = vmatprep.mubr.f32.mxu0 0.0
  %1442 = vmatmul.mubr.f32.gmra.mrb[0].mxu0 %v1233
  %v1443 = vpop.f32.mrb[0].mxu0
  %v1444 = vadd.f32 0.0, %v1443
  %v1445 = vpop.f32.mrb[0].mxu0
  %1446 = vmatprep.mubr.f32.mxu0 0.0
  %1447 = vmatmul.mubr.f32.gmra.mrb[0].mxu0 %v1234
  %v1448 = vpop.f32.mrb[0].mxu0
  %v1449 = vadd.f32 0.0, %v1448
  %v1450 = vpop.f32.mrb[0].mxu0
  %1451 = vmatprep.mubr.f32.mxu0 0.0
  %1452 = vmatmul.mubr.f32.gmra.mrb[0].mxu0 %v1235
  %v1453 = vpop.f32.mrb[0].mxu0
  %v1454 = vadd.f32 0.0, %v1453
  %v1455 = vpop.f32.mrb[0].mxu0
  %1456 = vmatprep.mubr.f32.mxu0 0.0
  %1457 = vmatmul.mubr.f32.gmra.mrb[0].mxu0 %v1236
  %v1458 = vpop.f32.mrb[0].mxu0
  %v1459 = vadd.f32 0.0, %v1458
  %v1460 = vpop.f32.mrb[0].mxu0
  %1461 = vmatprep.mubr.f32.mxu0 0.0
  %1462 = vmatmul.mubr.f32.gmra.mrb[0].mxu0 %v1237
  %v1463 = vpop.f32.mrb[0].mxu0
  %v1464 = vadd.f32 0.0, %v1463
  %v1465 = vpop.f32.mrb[0].mxu0
  %1466 = vmatprep.mubr.f32.mxu0 0.0
  %1467 = vmatmul.mubr.f32.gmra.mrb[0].mxu0 %v1238
  %v1468 = vpop.f32.mrb[0].mxu0
  %v1469 = vadd.f32 0.0, %v1468
  %v1470 = vpop.f32.mrb[0].mxu0
  %1471 = vmatprep.mubr.f32.mxu0 0.0
  %1472 = vmatmul.mubr.f32.gmra.mrb[0].mxu0 %v1239
  %v1473 = vpop.f32.mrb[0].mxu0
  %v1474 = vadd.f32 0.0, %v1473
  %v1475 = vpop.f32.mrb[0].mxu0
  %1476 = vmatprep.mubr.f32.mxu0 0.0
  %1477 = vmatmul.mubr.f32.gmra.mrb[0].mxu0 %v1240
  %v1478 = vpop.f32.mrb[0].mxu0
  %v1479 = vadd.f32 0.0, %v1478
  %v1480 = vpop.f32.mrb[0].mxu0
  %1481 = vmatprep.mubr.f32.mxu0 0.0
  %1482 = vmatmul.mubr.f32.gmra.mrb[0].mxu0 %v1241
  %v1483 = vpop.f32.mrb[0].mxu0
  %v1484 = vadd.f32 0.0, %v1483
  %v1485 = vpop.f32.mrb[0].mxu0
  %1486 = vmatprep.mubr.f32.mxu0 0.0
  %1487 = vmatmul.mubr.f32.gmra.mrb[0].mxu0 %v1242
  %v1488 = vpop.f32.mrb[0].mxu0
  %v1489 = vadd.f32 0.0, %v1488
  %v1490 = vpop.f32.mrb[0].mxu0
  %1491 = vmatprep.mubr.f32.mxu0 0.0
  %1492 = vmatmul.mubr.f32.gmra.mrb[0].mxu0 %v1243
  %v1493 = vpop.f32.mrb[0].mxu0
  %v1494 = vadd.f32 0.0, %v1493
  %v1495 = vpop.f32.mrb[0].mxu0
  %1496 = vmatprep.mubr.f32.mxu0 0.0
  %1497 = vmatmul.mubr.f32.gmra.mrb[0].mxu0 %v1244
  %v1498 = vpop.f32.mrb[0].mxu0
  %v1499 = vadd.f32 0.0, %v1498
  %v1500 = vpop.f32.mrb[0].mxu0
  %1501 = vmatprep.mubr.f32.mxu0 0.0
  %1502 = vmatmul.mubr.f32.gmra.mrb[0].mxu0 %v1245
  %v1503 = vpop.f32.mrb[0].mxu0
  %v1504 = vadd.f32 0.0, %v1503
  %v1505 = vpop.f32.mrb[0].mxu0
  %1506 = vmatprep.mubr.f32.mxu0 0.0
  %1507 = vmatmul.mubr.f32.gmra.mrb[0].mxu0 %v1246
  %v1508 = vpop.f32.mrb[0].mxu0
  %v1509 = vadd.f32 0.0, %v1508
  %v1510 = vpop.f32.mrb[0].mxu0
  %1511 = vdwg.mxu0
  %v1512 = vmul.f32 %v1314, %v1414
  %v1513 = vmul.f32 %v1319, %v1419
  %v1514 = vmul.f32 %v1324, %v1424
  %v1515 = vmul.f32 %v1329, %v1429
  %v1516 = vmul.f32 %v1334, %v1434
  %v1517 = vmul.f32 %v1339, %v1439
  %v1518 = vmul.f32 %v1344, %v1444
  %v1519 = vmul.f32 %v1349, %v1449
  %v1520 = vmul.f32 %v1354, %v1454
  %v1521 = vmul.f32 %v1359, %v1459
  %v1522 = vmul.f32 %v1364, %v1464
  %v1523 = vmul.f32 %v1369, %v1469
  %v1524 = vmul.f32 %v1374, %v1474
  %v1525 = vmul.f32 %v1379, %v1479
  %v1526 = vmul.f32 %v1384, %v1484
  %v1527 = vmul.f32 %v1389, %v1489
  %v1528 = vmul.f32 %v1394, %v1494
  %v1529 = vmul.f32 %v1399, %v1499
  %v1530 = vmul.f32 %v1404, %v1504
  %v1531 = vmul.f32 %v1409, %v1509
  %v1532 = vpack.c.bf16 %v1513, %v1512
  %v1533 = vpack.c.bf16 %v1515, %v1514
  %v1534 = vpack.c.bf16 %v1517, %v1516
  %v1535 = vpack.c.bf16 %v1519, %v1518
  %v1536 = vpack.c.bf16 %v1521, %v1520
  %v1537 = vpack.c.bf16 %v1523, %v1522
  %v1538 = vpack.c.bf16 %v1525, %v1524
  %v1539 = vpack.c.bf16 %v1527, %v1526
  %v1540 = vpack.c.bf16 %v1529, %v1528
  %v1541 = vpack.c.bf16 %v1531, %v1530
  %v1542 = vlaneseq
  %v1543 = vshrl.u32 %v1542, 7
  %v1544 = vsub.s32 0, %v1543
  %v1545 = vrot.slane %v71, %v1544
  %v1550 = vunpack.c.l.b16 %v60
  %v1551 = vunpack.c.l.b16 %v61
  %v1552 = vunpack.c.l.b16 %v62
  %v1553 = vunpack.c.l.b16 %v63
  %v1554 = vpack.c.b16 %v1551, %v1550
  %v1555 = vpack.c.b16 %v1553, %v1552
  %v1559 = vsel %vm468, %v1532, 0
  %v1562 = vsel %vm468, %v1533, 0
  %v1565 = vsel %vm468, %v1534, 0
  %v1568 = vsel %vm468, %v1535, 0
  %v1571 = vsel %vm468, %v1536, 0
  %v1574 = vsel %vm468, %v1537, 0
  %v1577 = vsel %vm468, %v1538, 0
  %v1580 = vsel %vm468, %v1539, 0
  %v1583 = vsel %vm468, %v1540, 0
  %v1586 = vsel %vm468, %v1541, 0
  %1588 = vmatprep.subr.bf16.mxu0 0
  %1589 = vmatpush1.bf16.msra.mxu0 %v1554
  %1590 = vmatprep.subr.bf16.mxu0 0
  %1591 = vmatpush1.bf16.msra.mxu0 %v1555
  %1592 = vmatprep.subr.bf16.mxu0 0
  %1593 = vmatpush1.bf16.msra.mxu0 0
  %1594 = vmatprep.subr.bf16.mxu0 0
  %1595 = vmatpush1.bf16.msra.mxu0 0
  %1596 = vmatprep.subr.bf16.mxu0 0
  %1597 = vmatpush1.bf16.msra.mxu0 0
  %1598 = vmatprep.subr.bf16.mxu0 0
  %1599 = vmatpush1.bf16.msra.mxu0 0
  %1600 = vmatprep.subr.bf16.mxu0 0
  %1601 = vmatpush1.bf16.msra.mxu0 0
  %1602 = vmatprep.subr.bf16.mxu0 0
  %1603 = vmatpush1.bf16.msra.mxu0 0
  %1604 = vmatprep.subr.bf16.mxu0 0
  %1605 = vmatpush1.bf16.msra.mxu0 0
  %1606 = vmatprep.subr.bf16.mxu0 0
  %1607 = vmatpush1.bf16.msra.mxu0 0
  %1608 = vmatprep.subr.bf16.mxu0 0
  %1609 = vmatpush1.bf16.msra.mxu0 0
  %1610 = vmatprep.subr.bf16.mxu0 0
  %1611 = vmatpush1.bf16.msra.mxu0 0
  %1612 = vmatprep.subr.bf16.mxu0 0
  %1613 = vmatpush1.bf16.msra.mxu0 0
  %1614 = vmatprep.subr.bf16.mxu0 0
  %1615 = vmatpush1.bf16.msra.mxu0 0
  %1616 = vmatprep.subr.bf16.mxu0 0
  %1617 = vmatpush1.bf16.msra.mxu0 0
  %1618 = vmatprep.subr.bf16.mxu0 0
  %1619 = vmatpush1.bf16.msra.mxu0 0
  %1620 = vmatprep.mubr.bf16.mxu0 0
  %1621 = vmatmul.mubr.bf16.gmra.mrb[0].mxu0 %v1559
  %v1622 = vpop.f32.mrb[0].mxu0
  %v1623 = vadd.f32 %v1545, %v1622
  %v1624 = vpop.f32.mrb[0].mxu0
  %v1625 = vpop.f32.mrb[0].mxu0
  %v1626 = vadd.f32 %v1545, %v1625
  %v1627 = vpop.f32.mrb[0].mxu0
  %1628 = vmatprep.mubr.bf16.mxu0 0
  %1629 = vmatmul.mubr.bf16.gmra.mrb[0].mxu0 %v1562
  %v1630 = vpop.f32.mrb[0].mxu0
  %v1631 = vadd.f32 %v1545, %v1630
  %v1632 = vpop.f32.mrb[0].mxu0
  %v1633 = vpop.f32.mrb[0].mxu0
  %v1634 = vadd.f32 %v1545, %v1633
  %v1635 = vpop.f32.mrb[0].mxu0
  %1636 = vmatprep.mubr.bf16.mxu0 0
  %1637 = vmatmul.mubr.bf16.gmra.mrb[0].mxu0 %v1565
  %v1638 = vpop.f32.mrb[0].mxu0
  %v1639 = vadd.f32 %v1545, %v1638
  %v1640 = vpop.f32.mrb[0].mxu0
  %v1641 = vpop.f32.mrb[0].mxu0
  %v1642 = vadd.f32 %v1545, %v1641
  %v1643 = vpop.f32.mrb[0].mxu0
  %1644 = vmatprep.mubr.bf16.mxu0 0
  %1645 = vmatmul.mubr.bf16.gmra.mrb[0].mxu0 %v1568
  %v1646 = vpop.f32.mrb[0].mxu0
  %v1647 = vadd.f32 %v1545, %v1646
  %v1648 = vpop.f32.mrb[0].mxu0
  %v1649 = vpop.f32.mrb[0].mxu0
  %v1650 = vadd.f32 %v1545, %v1649
  %v1651 = vpop.f32.mrb[0].mxu0
  %1652 = vmatprep.mubr.bf16.mxu0 0
  %1653 = vmatmul.mubr.bf16.gmra.mrb[0].mxu0 %v1571
  %v1654 = vpop.f32.mrb[0].mxu0
  %v1655 = vadd.f32 %v1545, %v1654
  %v1656 = vpop.f32.mrb[0].mxu0
  %v1657 = vpop.f32.mrb[0].mxu0
  %v1658 = vadd.f32 %v1545, %v1657
  %v1659 = vpop.f32.mrb[0].mxu0
  %1660 = vmatprep.mubr.bf16.mxu0 0
  %1661 = vmatmul.mubr.bf16.gmra.mrb[0].mxu0 %v1574
  %v1662 = vpop.f32.mrb[0].mxu0
  %v1663 = vadd.f32 %v1545, %v1662
  %v1664 = vpop.f32.mrb[0].mxu0
  %v1665 = vpop.f32.mrb[0].mxu0
  %v1666 = vadd.f32 %v1545, %v1665
  %v1667 = vpop.f32.mrb[0].mxu0
  %1668 = vmatprep.mubr.bf16.mxu0 0
  %1669 = vmatmul.mubr.bf16.gmra.mrb[0].mxu0 %v1577
  %v1670 = vpop.f32.mrb[0].mxu0
  %v1671 = vadd.f32 %v1545, %v1670
  %v1672 = vpop.f32.mrb[0].mxu0
  %v1673 = vpop.f32.mrb[0].mxu0
  %v1674 = vadd.f32 %v1545, %v1673
  %v1675 = vpop.f32.mrb[0].mxu0
  %1676 = vmatprep.mubr.bf16.mxu0 0
  %1677 = vmatmul.mubr.bf16.gmra.mrb[0].mxu0 %v1580
  %v1678 = vpop.f32.mrb[0].mxu0
  %v1679 = vadd.f32 %v1545, %v1678
  %v1680 = vpop.f32.mrb[0].mxu0
  %v1681 = vpop.f32.mrb[0].mxu0
  %v1682 = vadd.f32 %v1545, %v1681
  %v1683 = vpop.f32.mrb[0].mxu0
  %1684 = vmatprep.mubr.bf16.mxu0 0
  %1685 = vmatmul.mubr.bf16.gmra.mrb[0].mxu0 %v1583
  %v1686 = vpop.f32.mrb[0].mxu0
  %v1687 = vadd.f32 %v1545, %v1686
  %v1688 = vpop.f32.mrb[0].mxu0
  %v1689 = vpop.f32.mrb[0].mxu0
  %v1690 = vadd.f32 %v1545, %v1689
  %v1691 = vpop.f32.mrb[0].mxu0
  %1692 = vmatprep.mubr.bf16.mxu0 0
  %1693 = vmatmul.mubr.bf16.gmra.mrb[0].mxu0 %v1586
  %v1694 = vpop.f32.mrb[0].mxu0
  %v1695 = vadd.f32 %v1545, %v1694
  %v1696 = vpop.f32.mrb[0].mxu0
  %v1697 = vpop.f32.mrb[0].mxu0
  %v1698 = vadd.f32 %v1545, %v1697
  %v1699 = vpop.f32.mrb[0].mxu0
  %1700 = vdwg.mxu0
  %v1701 = vmax.f32 %v1623, 0.0
  %v1702 = vmax.f32 %v1626, 0.0
  %v1703 = vmax.f32 %v1631, 0.0
  %v1704 = vmax.f32 %v1634, 0.0
  %v1705 = vmax.f32 %v1639, 0.0
  %v1706 = vmax.f32 %v1642, 0.0
  %v1707 = vmax.f32 %v1647, 0.0
  %v1708 = vmax.f32 %v1650, 0.0
  %v1709 = vmax.f32 %v1655, 0.0
  %v1710 = vmax.f32 %v1658, 0.0
  %v1711 = vmax.f32 %v1663, 0.0
  %v1712 = vmax.f32 %v1666, 0.0
  %v1713 = vmax.f32 %v1671, 0.0
  %v1714 = vmax.f32 %v1674, 0.0
  %v1715 = vmax.f32 %v1679, 0.0
  %v1716 = vmax.f32 %v1682, 0.0
  %v1717 = vmax.f32 %v1687, 0.0
  %v1718 = vmax.f32 %v1690, 0.0
  %v1719 = vmax.f32 %v1695, 0.0
  %v1720 = vmax.f32 %v1698, 0.0
  %v1721 = vpack.c.bf16 %v1702, %v1701
  %v1722 = vpack.c.bf16 %v1704, %v1703
  %v1723 = vpack.c.bf16 %v1706, %v1705
  %v1724 = vpack.c.bf16 %v1708, %v1707
  %v1725 = vpack.c.bf16 %v1710, %v1709
  %v1726 = vpack.c.bf16 %v1712, %v1711
  %v1727 = vpack.c.bf16 %v1714, %v1713
  %v1728 = vpack.c.bf16 %v1716, %v1715
  %v1729 = vpack.c.bf16 %v1718, %v1717
  %v1730 = vpack.c.bf16 %v1720, %v1719
  %v1731 = vlaneseq
  %v1732 = vshrl.u32 %v1731, 7
  %v1733 = vsub.s32 0, %v1732
  %v1734 = vrot.slane %v72, %v1733
  %v1739 = vunpack.c.l.b16 %v64
  %v1740 = vunpack.c.l.b16 %v65
  %v1741 = vunpack.c.l.b16 %v66
  %v1742 = vunpack.c.l.b16 %v67
  %v1743 = vpack.c.b16 %v1740, %v1739
  %v1744 = vpack.c.b16 %v1742, %v1741
  %v1748 = vsel %vm468, %v1721, 0
  %v1751 = vsel %vm468, %v1722, 0
  %v1754 = vsel %vm468, %v1723, 0
  %v1757 = vsel %vm468, %v1724, 0
  %v1760 = vsel %vm468, %v1725, 0
  %v1763 = vsel %vm468, %v1726, 0
  %v1766 = vsel %vm468, %v1727, 0
  %v1769 = vsel %vm468, %v1728, 0
  %v1772 = vsel %vm468, %v1729, 0
  %v1775 = vsel %vm468, %v1730, 0
  %1777 = vmatprep.subr.bf16.mxu0 0
  %1778 = vmatpush1.bf16.msra.mxu0 %v1743
  %1779 = vmatprep.subr.bf16.mxu0 0
  %1780 = vmatpush1.bf16.msra.mxu0 %v1744
  %1781 = vmatprep.subr.bf16.mxu0 0
  %1782 = vmatpush1.bf16.msra.mxu0 0
  %1783 = vmatprep.subr.bf16.mxu0 0
  %1784 = vmatpush1.bf16.msra.mxu0 0
  %1785 = vmatprep.subr.bf16.mxu0 0
  %1786 = vmatpush1.bf16.msra.mxu0 0
  %1787 = vmatprep.subr.bf16.mxu0 0
  %1788 = vmatpush1.bf16.msra.mxu0 0
  %1789 = vmatprep.subr.bf16.mxu0 0
  %1790 = vmatpush1.bf16.msra.mxu0 0
  %1791 = vmatprep.subr.bf16.mxu0 0
  %1792 = vmatpush1.bf16.msra.mxu0 0
  %1793 = vmatprep.subr.bf16.mxu0 0
  %1794 = vmatpush1.bf16.msra.mxu0 0
  %1795 = vmatprep.subr.bf16.mxu0 0
  %1796 = vmatpush1.bf16.msra.mxu0 0
  %1797 = vmatprep.subr.bf16.mxu0 0
  %1798 = vmatpush1.bf16.msra.mxu0 0
  %1799 = vmatprep.subr.bf16.mxu0 0
  %1800 = vmatpush1.bf16.msra.mxu0 0
  %1801 = vmatprep.subr.bf16.mxu0 0
  %1802 = vmatpush1.bf16.msra.mxu0 0
  %1803 = vmatprep.subr.bf16.mxu0 0
  %1804 = vmatpush1.bf16.msra.mxu0 0
  %1805 = vmatprep.subr.bf16.mxu0 0
  %1806 = vmatpush1.bf16.msra.mxu0 0
  %1807 = vmatprep.subr.bf16.mxu0 0
  %1808 = vmatpush1.bf16.msra.mxu0 0
  %1809 = vmatprep.mubr.bf16.mxu0 0
  %1810 = vmatmul.mubr.bf16.gmra.mrb[0].mxu0 %v1748
  %v1811 = vpop.f32.mrb[0].mxu0
  %v1812 = vadd.f32 %v1734, %v1811
  %v1813 = vpop.f32.mrb[0].mxu0
  %v1814 = vpop.f32.mrb[0].mxu0
  %v1815 = vadd.f32 %v1734, %v1814
  %v1816 = vpop.f32.mrb[0].mxu0
  %1817 = vmatprep.mubr.bf16.mxu0 0
  %1818 = vmatmul.mubr.bf16.gmra.mrb[0].mxu0 %v1751
  %v1819 = vpop.f32.mrb[0].mxu0
  %v1820 = vadd.f32 %v1734, %v1819
  %v1821 = vpop.f32.mrb[0].mxu0
  %v1822 = vpop.f32.mrb[0].mxu0
  %v1823 = vadd.f32 %v1734, %v1822
  %v1824 = vpop.f32.mrb[0].mxu0
  %1825 = vmatprep.mubr.bf16.mxu0 0
  %1826 = vmatmul.mubr.bf16.gmra.mrb[0].mxu0 %v1754
  %v1827 = vpop.f32.mrb[0].mxu0
  %v1828 = vadd.f32 %v1734, %v1827
  %v1829 = vpop.f32.mrb[0].mxu0
  %v1830 = vpop.f32.mrb[0].mxu0
  %v1831 = vadd.f32 %v1734, %v1830
  %v1832 = vpop.f32.mrb[0].mxu0
  %1833 = vmatprep.mubr.bf16.mxu0 0
  %1834 = vmatmul.mubr.bf16.gmra.mrb[0].mxu0 %v1757
  %v1835 = vpop.f32.mrb[0].mxu0
  %v1836 = vadd.f32 %v1734, %v1835
  %v1837 = vpop.f32.mrb[0].mxu0
  %v1838 = vpop.f32.mrb[0].mxu0
  %v1839 = vadd.f32 %v1734, %v1838
  %v1840 = vpop.f32.mrb[0].mxu0
  %1841 = vmatprep.mubr.bf16.mxu0 0
  %1842 = vmatmul.mubr.bf16.gmra.mrb[0].mxu0 %v1760
  %v1843 = vpop.f32.mrb[0].mxu0
  %v1844 = vadd.f32 %v1734, %v1843
  %v1845 = vpop.f32.mrb[0].mxu0
  %v1846 = vpop.f32.mrb[0].mxu0
  %v1847 = vadd.f32 %v1734, %v1846
  %v1848 = vpop.f32.mrb[0].mxu0
  %1849 = vmatprep.mubr.bf16.mxu0 0
  %1850 = vmatmul.mubr.bf16.gmra.mrb[0].mxu0 %v1763
  %v1851 = vpop.f32.mrb[0].mxu0
  %v1852 = vadd.f32 %v1734, %v1851
  %v1853 = vpop.f32.mrb[0].mxu0
  %v1854 = vpop.f32.mrb[0].mxu0
  %v1855 = vadd.f32 %v1734, %v1854
  %v1856 = vpop.f32.mrb[0].mxu0
  %1857 = vmatprep.mubr.bf16.mxu0 0
  %1858 = vmatmul.mubr.bf16.gmra.mrb[0].mxu0 %v1766
  %v1859 = vpop.f32.mrb[0].mxu0
  %v1860 = vadd.f32 %v1734, %v1859
  %v1861 = vpop.f32.mrb[0].mxu0
  %v1862 = vpop.f32.mrb[0].mxu0
  %v1863 = vadd.f32 %v1734, %v1862
  %v1864 = vpop.f32.mrb[0].mxu0
  %1865 = vmatprep.mubr.bf16.mxu0 0
  %1866 = vmatmul.mubr.bf16.gmra.mrb[0].mxu0 %v1769
  %v1867 = vpop.f32.mrb[0].mxu0
  %v1868 = vadd.f32 %v1734, %v1867
  %v1869 = vpop.f32.mrb[0].mxu0
  %v1870 = vpop.f32.mrb[0].mxu0
  %v1871 = vadd.f32 %v1734, %v1870
  %v1872 = vpop.f32.mrb[0].mxu0
  %1873 = vmatprep.mubr.bf16.mxu0 0
  %1874 = vmatmul.mubr.bf16.gmra.mrb[0].mxu0 %v1772
  %v1875 = vpop.f32.mrb[0].mxu0
  %v1876 = vadd.f32 %v1734, %v1875
  %v1877 = vpop.f32.mrb[0].mxu0
  %v1878 = vpop.f32.mrb[0].mxu0
  %v1879 = vadd.f32 %v1734, %v1878
  %v1880 = vpop.f32.mrb[0].mxu0
  %1881 = vmatprep.mubr.bf16.mxu0 0
  %1882 = vmatmul.mubr.bf16.gmra.mrb[0].mxu0 %v1775
  %v1883 = vpop.f32.mrb[0].mxu0
  %v1884 = vadd.f32 %v1734, %v1883
  %v1885 = vpop.f32.mrb[0].mxu0
  %v1886 = vpop.f32.mrb[0].mxu0
  %v1887 = vadd.f32 %v1734, %v1886
  %v1888 = vpop.f32.mrb[0].mxu0
  %1889 = vdwg.mxu0
  %v1890 = vmax.f32 %v1812, 0.0
  %v1891 = vmax.f32 %v1815, 0.0
  %v1892 = vmax.f32 %v1820, 0.0
  %v1893 = vmax.f32 %v1823, 0.0
  %v1894 = vmax.f32 %v1828, 0.0
  %v1895 = vmax.f32 %v1831, 0.0
  %v1896 = vmax.f32 %v1836, 0.0
  %v1897 = vmax.f32 %v1839, 0.0
  %v1898 = vmax.f32 %v1844, 0.0
  %v1899 = vmax.f32 %v1847, 0.0
  %v1900 = vmax.f32 %v1852, 0.0
  %v1901 = vmax.f32 %v1855, 0.0
  %v1902 = vmax.f32 %v1860, 0.0
  %v1903 = vmax.f32 %v1863, 0.0
  %v1904 = vmax.f32 %v1868, 0.0
  %v1905 = vmax.f32 %v1871, 0.0
  %v1906 = vmax.f32 %v1876, 0.0
  %v1907 = vmax.f32 %v1879, 0.0
  %v1908 = vmax.f32 %v1884, 0.0
  %v1909 = vmax.f32 %v1887, 0.0
  %v1910 = vpack.c.bf16 %v1891, %v1890
  %v1911 = vpack.c.bf16 %v1893, %v1892
  %v1912 = vpack.c.bf16 %v1895, %v1894
  %v1913 = vpack.c.bf16 %v1897, %v1896
  %v1914 = vpack.c.bf16 %v1899, %v1898
  %v1915 = vpack.c.bf16 %v1901, %v1900
  %v1916 = vpack.c.bf16 %v1903, %v1902
  %v1917 = vpack.c.bf16 %v1905, %v1904
  %v1918 = vpack.c.bf16 %v1907, %v1906
  %v1919 = vpack.c.bf16 %v1909, %v1908
  %v1920 = vld [vmem:[%s5] sm:$0xf]
  %v1921 = vld [vmem:[%s5 + $0x4] sm:$0xf]
  %v1922 = vld [vmem:[%s5 + $0x8] sm:$0xf]
  %v1923 = vld [vmem:[%s5 + $0xc] sm:$0xf]
  %s1924 = sld [smem:[#allocation2]]
  %v1925 = vstv %s1924
  %v1930 = vunpack.c.l.b16 %v1920
  %v1931 = vunpack.c.l.b16 %v1921
  %v1932 = vunpack.c.l.b16 %v1922
  %v1933 = vunpack.c.l.b16 %v1923
  %v1934 = vpack.c.b16 %v1931, %v1930
  %v1935 = vpack.c.b16 %v1933, %v1932
  %v1939 = vsel %vm468, %v1910, 0
  %v1942 = vsel %vm468, %v1911, 0
  %v1945 = vsel %vm468, %v1912, 0
  %v1948 = vsel %vm468, %v1913, 0
  %v1951 = vsel %vm468, %v1914, 0
  %v1954 = vsel %vm468, %v1915, 0
  %v1957 = vsel %vm468, %v1916, 0
  %v1960 = vsel %vm468, %v1917, 0
  %v1963 = vsel %vm468, %v1918, 0
  %v1966 = vsel %vm468, %v1919, 0
  %1968 = vmatprep.subr.bf16.mxu0 0
  %1969 = vmatpush1.bf16.msra.mxu0 %v1934
  %1970 = vmatprep.subr.bf16.mxu0 0
  %1971 = vmatpush1.bf16.msra.mxu0 %v1935
  %1972 = vmatprep.subr.bf16.mxu0 0
  %1973 = vmatpush1.bf16.msra.mxu0 0
  %1974 = vmatprep.subr.bf16.mxu0 0
  %1975 = vmatpush1.bf16.msra.mxu0 0
  %1976 = vmatprep.subr.bf16.mxu0 0
  %1977 = vmatpush1.bf16.msra.mxu0 0
  %1978 = vmatprep.subr.bf16.mxu0 0
  %1979 = vmatpush1.bf16.msra.mxu0 0
  %1980 = vmatprep.subr.bf16.mxu0 0
  %1981 = vmatpush1.bf16.msra.mxu0 0
  %1982 = vmatprep.subr.bf16.mxu0 0
  %1983 = vmatpush1.bf16.msra.mxu0 0
  %1984 = vmatprep.subr.bf16.mxu0 0
  %1985 = vmatpush1.bf16.msra.mxu0 0
  %1986 = vmatprep.subr.bf16.mxu0 0
  %1987 = vmatpush1.bf16.msra.mxu0 0
  %1988 = vmatprep.subr.bf16.mxu0 0
  %1989 = vmatpush1.bf16.msra.mxu0 0
  %1990 = vmatprep.subr.bf16.mxu0 0
  %1991 = vmatpush1.bf16.msra.mxu0 0
  %1992 = vmatprep.subr.bf16.mxu0 0
  %1993 = vmatpush1.bf16.msra.mxu0 0
  %1994 = vmatprep.subr.bf16.mxu0 0
  %1995 = vmatpush1.bf16.msra.mxu0 0
  %1996 = vmatprep.subr.bf16.mxu0 0
  %1997 = vmatpush1.bf16.msra.mxu0 0
  %1998 = vmatprep.subr.bf16.mxu0 0
  %1999 = vmatpush1.bf16.msra.mxu0 0
  %2000 = vmatprep.mubr.bf16.mxu0 0
  %2001 = vmatmul.mubr.bf16.gmra.mrb[0].mxu0 %v1939
  %v2002 = vpop.f32.mrb[0].mxu0
  %v2003 = vadd.f32 %v1925, %v2002
  %v2004 = vpop.f32.mrb[0].mxu0
  %v2005 = vpop.f32.mrb[0].mxu0
  %v2006 = vadd.f32 %v1925, %v2005
  %v2007 = vpop.f32.mrb[0].mxu0
  %2008 = vmatprep.mubr.bf16.mxu0 0
  %2009 = vmatmul.mubr.bf16.gmra.mrb[0].mxu0 %v1942
  %v2010 = vpop.f32.mrb[0].mxu0
  %v2011 = vadd.f32 %v1925, %v2010
  %v2012 = vpop.f32.mrb[0].mxu0
  %v2013 = vpop.f32.mrb[0].mxu0
  %v2014 = vadd.f32 %v1925, %v2013
  %v2015 = vpop.f32.mrb[0].mxu0
  %2016 = vmatprep.mubr.bf16.mxu0 0
  %2017 = vmatmul.mubr.bf16.gmra.mrb[0].mxu0 %v1945
  %v2018 = vpop.f32.mrb[0].mxu0
  %v2019 = vadd.f32 %v1925, %v2018
  %v2020 = vpop.f32.mrb[0].mxu0
  %v2021 = vpop.f32.mrb[0].mxu0
  %v2022 = vadd.f32 %v1925, %v2021
  %v2023 = vpop.f32.mrb[0].mxu0
  %2024 = vmatprep.mubr.bf16.mxu0 0
  %2025 = vmatmul.mubr.bf16.gmra.mrb[0].mxu0 %v1948
  %v2026 = vpop.f32.mrb[0].mxu0
  %v2027 = vadd.f32 %v1925, %v2026
  %v2028 = vpop.f32.mrb[0].mxu0
  %v2029 = vpop.f32.mrb[0].mxu0
  %v2030 = vadd.f32 %v1925, %v2029
  %v2031 = vpop.f32.mrb[0].mxu0
  %2032 = vmatprep.mubr.bf16.mxu0 0
  %2033 = vmatmul.mubr.bf16.gmra.mrb[0].mxu0 %v1951
  %v2034 = vpop.f32.mrb[0].mxu0
  %v2035 = vadd.f32 %v1925, %v2034
  %v2036 = vpop.f32.mrb[0].mxu0
  %v2037 = vpop.f32.mrb[0].mxu0
  %v2038 = vadd.f32 %v1925, %v2037
  %v2039 = vpop.f32.mrb[0].mxu0
  %2040 = vmatprep.mubr.bf16.mxu0 0
  %2041 = vmatmul.mubr.bf16.gmra.mrb[0].mxu0 %v1954
  %v2042 = vpop.f32.mrb[0].mxu0
  %v2043 = vadd.f32 %v1925, %v2042
  %v2044 = vpop.f32.mrb[0].mxu0
  %v2045 = vpop.f32.mrb[0].mxu0
  %v2046 = vadd.f32 %v1925, %v2045
  %v2047 = vpop.f32.mrb[0].mxu0
  %2048 = vmatprep.mubr.bf16.mxu0 0
  %2049 = vmatmul.mubr.bf16.gmra.mrb[0].mxu0 %v1957
  %v2050 = vpop.f32.mrb[0].mxu0
  %v2051 = vadd.f32 %v1925, %v2050
  %v2052 = vpop.f32.mrb[0].mxu0
  %v2053 = vpop.f32.mrb[0].mxu0
  %v2054 = vadd.f32 %v1925, %v2053
  %v2055 = vpop.f32.mrb[0].mxu0
  %2056 = vmatprep.mubr.bf16.mxu0 0
  %2057 = vmatmul.mubr.bf16.gmra.mrb[0].mxu0 %v1960
  %v2058 = vpop.f32.mrb[0].mxu0
  %v2059 = vadd.f32 %v1925, %v2058
  %v2060 = vpop.f32.mrb[0].mxu0
  %v2061 = vpop.f32.mrb[0].mxu0
  %v2062 = vadd.f32 %v1925, %v2061
  %v2063 = vpop.f32.mrb[0].mxu0
  %2064 = vmatprep.mubr.bf16.mxu0 0
  %2065 = vmatmul.mubr.bf16.gmra.mrb[0].mxu0 %v1963
  %v2066 = vpop.f32.mrb[0].mxu0
  %v2067 = vadd.f32 %v1925, %v2066
  %v2068 = vpop.f32.mrb[0].mxu0
  %v2069 = vpop.f32.mrb[0].mxu0
  %v2070 = vadd.f32 %v1925, %v2069
  %v2071 = vpop.f32.mrb[0].mxu0
  %2072 = vmatprep.mubr.bf16.mxu0 0
  %2073 = vmatmul.mubr.bf16.gmra.mrb[0].mxu0 %v1966
  %v2074 = vpop.f32.mrb[0].mxu0
  %v2075 = vadd.f32 %v1925, %v2074
  %v2076 = vpop.f32.mrb[0].mxu0
  %v2077 = vpop.f32.mrb[0].mxu0
  %v2078 = vadd.f32 %v1925, %v2077
  %v2079 = vpop.f32.mrb[0].mxu0
  %2080 = vdwg.mxu0
  %v2081 = vpack.c.bf16 %v2006, %v2003
  %v2082 = vpack.c.bf16 %v2014, %v2011
  %v2083 = vpack.c.bf16 %v2022, %v2019
  %v2084 = vpack.c.bf16 %v2030, %v2027
  %v2085 = vpack.c.bf16 %v2038, %v2035
  %v2086 = vpack.c.bf16 %v2046, %v2043
  %v2087 = vpack.c.bf16 %v2054, %v2051
  %v2088 = vpack.c.bf16 %v2062, %v2059
  %v2089 = vpack.c.bf16 %v2070, %v2067
  %v2090 = vpack.c.bf16 %v2078, %v2075
  %v2101 = vunpack.c.l.b16 %v2081
  %v2102 = vunpack.c.h.b16 %v2081
  %v2103 = vunpack.c.l.b16 %v2082
  %v2104 = vunpack.c.h.b16 %v2082
  %v2105 = vunpack.c.l.b16 %v2083
  %v2106 = vunpack.c.h.b16 %v2083
  %v2107 = vunpack.c.l.b16 %v2084
  %v2108 = vunpack.c.h.b16 %v2084
  %v2109 = vunpack.c.l.b16 %v2085
  %v2110 = vunpack.c.h.b16 %v2085
  %v2111 = vunpack.c.l.b16 %v2086
  %v2112 = vunpack.c.h.b16 %v2086
  %v2113 = vunpack.c.l.b16 %v2087
  %v2114 = vunpack.c.h.b16 %v2087
  %v2115 = vunpack.c.l.b16 %v2088
  %v2116 = vunpack.c.h.b16 %v2088
  %v2117 = vunpack.c.l.b16 %v2089
  %v2118 = vunpack.c.h.b16 %v2089
  %v2119 = vunpack.c.l.b16 %v2090
  %v2120 = vunpack.c.h.b16 %v2090
  %v2121 = vpack.c.b16 %v2101, %v2101
  %v2122 = vpack.c.b16 %v2102, %v2102
  %v2123 = vpack.c.b16 %v2103, %v2103
  %v2124 = vpack.c.b16 %v2104, %v2104
  %v2125 = vpack.c.b16 %v2105, %v2105
  %v2126 = vpack.c.b16 %v2106, %v2106
  %v2127 = vpack.c.b16 %v2107, %v2107
  %v2128 = vpack.c.b16 %v2108, %v2108
  %v2129 = vpack.c.b16 %v2109, %v2109
  %v2130 = vpack.c.b16 %v2110, %v2110
  %v2131 = vpack.c.b16 %v2111, %v2111
  %v2132 = vpack.c.b16 %v2112, %v2112
  %v2133 = vpack.c.b16 %v2113, %v2113
  %v2134 = vpack.c.b16 %v2114, %v2114
  %v2135 = vpack.c.b16 %v2115, %v2115
  %v2136 = vpack.c.b16 %v2116, %v2116
  %v2137 = vpack.c.b16 %v2117, %v2117
  %v2138 = vpack.c.b16 %v2118, %v2118
  %v2139 = vpack.c.b16 %v2119, %v2119
  %v2140 = vpack.c.b16 %v2120, %v2120
  %2161 = vst [vmem:[%s7] sm:$0xf] %v2121
  %2162 = vst [vmem:[%s7 + $0x4] sm:$0xf] %v2122
  %2163 = vst [vmem:[%s7 + $0x8] sm:$0xf] %v2123
  %2164 = vst [vmem:[%s7 + $0xc] sm:$0xf] %v2124
  %2165 = vst [vmem:[%s7 + $0x10] sm:$0xf] %v2125
  %2166 = vst [vmem:[%s7 + $0x14] sm:$0xf] %v2126
  %2167 = vst [vmem:[%s7 + $0x18] sm:$0xf] %v2127
  %2168 = vst [vmem:[%s7 + $0x1c] sm:$0xf] %v2128
  %2169 = vst [vmem:[%s7 + $0x20] sm:$0xf] %v2129
  %2170 = vst [vmem:[%s7 + $0x24] sm:$0xf] %v2130
  %2171 = vst [vmem:[%s7 + $0x28] sm:$0xf] %v2131
  %2172 = vst [vmem:[%s7 + $0x2c] sm:$0xf] %v2132
  %2173 = vst [vmem:[%s7 + $0x30] sm:$0xf] %v2133
  %2174 = vst [vmem:[%s7 + $0x34] sm:$0xf] %v2134
  %2175 = vst [vmem:[%s7 + $0x38] sm:$0xf] %v2135
  %2176 = vst [vmem:[%s7 + $0x3c] sm:$0xf] %v2136
  %2177 = vst [vmem:[%s7 + $0x40] sm:$0xf] %v2137
  %2178 = vst [vmem:[%s7 + $0x44] sm:$0xf] %v2138
  %2179 = vst [vmem:[%s7 + $0x48] sm:$0xf] %v2139
  %2180 = vst [vmem:[%s7 + $0x4c] sm:$0xf] %v2140
  // Predicated region
  $region30: #{gcn_forward.1} parent=0 // pred_check
    _
  $region31: #{gcn_forward.1} parent=0 // pred_check_branch
    %2182 = sbr.rel (0) target = $region33
  $region32: #{gcn_forward.1} parent=0 // pred_region
    _
  $region33: #{gcn_forward.1} parent=0 // pred_fallthru
    _
  // Predicated region
  $region34: #{gcn_forward.1} parent=0 // pred_check
    _
  $region35: #{gcn_forward.1} parent=0 // pred_check_branch
    %2184 = sbr.rel (0) target = $region37
  $region36: #{gcn_forward.1} parent=0 // pred_region
    _
  $region37: #{gcn_forward.1} parent=0 // pred_fallthru
    _

</llo_original>
